<compile_context>
chip_gen: v6e
topology: v6e:2x2x1
jax: 0.10.0
libtpu: 0.0.40
codegen_flags: <defaults>
</compile_context>

<pallas_src>
import math

import jax
import jax.numpy as jnp
from jax.experimental import pallas as pl
from jax.experimental.pallas import tpu as pltpu

D_MODEL = 128
N_HEADS = 4
D_K = D_MODEL // N_HEADS
_SCALE = 1.0 / math.sqrt(D_K)


# --------------------------------------------------------------------------
# Kernel bodies
# --------------------------------------------------------------------------
def _attend_project(Q, K, V, wo_ref, bo_ref, o_ref):
    """Per-head attention + output projection. Q/K/V are (Bt*S, 128) f32
    (scale already folded into Q via the weights)."""
    Bt, S, D = o_ref.shape
    BtS = Bt * S

    Qb = Q.reshape(Bt, S, D).astype(jnp.bfloat16)
    Kb = K.reshape(Bt, S, D).astype(jnp.bfloat16)
    Vb = V.reshape(Bt, S, D).astype(jnp.bfloat16)

    # f32 accumulator for the output projection (no bf16 ctx round trip, no
    # 32-lane masked VMEM stores).
    out_acc = jnp.zeros((BtS, D), jnp.float32)

    # Static unroll over the 4 heads.  The per-head compute (K=32 contractions)
    # is hidden under the HBM DMA in this memory-bound regime.
    for h in range(N_HEADS):
        lo = h * D_K
        Qh = Qb[:, :, lo:lo + D_K]          # (Bt, S, 32) bf16
        Kh = Kb[:, :, lo:lo + D_K]
        Vh = Vb[:, :, lo:lo + D_K]

        # scores = (Qh * scale) @ Kh^T -- contraction on the last dims.
        s = jnp.einsum('bqd,bkd->bqk', Qh, Kh,
                       preferred_element_type=jnp.float32)
        # numerically-stable softmax in f32 (matches F.softmax semantics).
        s = s - jnp.max(s, axis=-1, keepdims=True)
        p = jnp.exp(s)
        attn = p * pl.reciprocal(jnp.sum(p, axis=-1, keepdims=True), approx=True)

        ctx = jnp.einsum('bqk,bkd->bqd', attn.astype(jnp.bfloat16), Vh,
                         preferred_element_type=jnp.float32)   # (Bt, S, 32) f32

        # Output projection contribution of this head: (Bt*S, 32) @ (32, 128).
        # The Wo row slice is sublane-aligned and full 128 lanes wide.
        out_acc = out_acc + jnp.dot(
            ctx.reshape(BtS, D_K).astype(jnp.bfloat16),
            wo_ref[lo:lo + D_K, :],
            preferred_element_type=jnp.float32)

    out = out_acc + bo_ref[...]
    o_ref[...] = out.reshape(Bt, S, D).astype(o_ref.dtype)


def mha_kernel(q_ref, k_ref, v_ref,
               wq_ref, bq_ref, wk_ref, bk_ref, wv_ref, bv_ref,
               wo_ref, bo_ref, o_ref):
    """General path: distinct q / k / v inputs, three 128x128 projections."""
    Bt, S, D = q_ref.shape
    x_q = q_ref[...].reshape(Bt * S, D).astype(jnp.bfloat16)
    x_k = k_ref[...].reshape(Bt * S, D).astype(jnp.bfloat16)
    x_v = v_ref[...].reshape(Bt * S, D).astype(jnp.bfloat16)

    Q = jnp.dot(x_q, wq_ref[...], preferred_element_type=jnp.float32) + bq_ref[...]
    K = jnp.dot(x_k, wk_ref[...], preferred_element_type=jnp.float32) + bk_ref[...]
    V = jnp.dot(x_v, wv_ref[...], preferred_element_type=jnp.float32) + bv_ref[...]

    _attend_project(Q, K, V, wo_ref, bo_ref, o_ref)


def mha_self_kernel(x_ref, wqkv_ref, bqkv_ref, wo_ref, bo_ref, o_ref):
    """Self-attention fast path: x DMA'd once, fused (128, 384) QKV matmul."""
    Bt, S, D = x_ref.shape
    x = x_ref[...].reshape(Bt * S, D).astype(jnp.bfloat16)

    qkv = jnp.dot(x, wqkv_ref[...], preferred_element_type=jnp.float32) + bqkv_ref[...]
    # 128-lane-aligned slices at offsets 0 / 128 / 256.
    Q = qkv[:, 0:D]
    K = qkv[:, D:2 * D]
    V = qkv[:, 2 * D:3 * D]

    _attend_project(Q, K, V, wo_ref, bo_ref, o_ref)


# --------------------------------------------------------------------------
# Host-side wrapper
# --------------------------------------------------------------------------
def _vmem_bytes(bt, S, n_inputs):
    """Rough per-step VMEM footprint (double-buffered I/O + activations + scores)."""
    rows = bt * S
    io = (n_inputs + 1) * 2 * rows * D_MODEL * 4        # f32 in/out blocks x2 buffers
    act = 10 * rows * D_MODEL * 4                        # Q/K/V f32+bf16, acc, fused qkv
    scores = 3 * bt * N_HEADS * S * S * 4                # ~3 live f32 score copies
    weights = 4 * D_MODEL * D_MODEL * 2 + 6 * D_MODEL * 4
    return io + act + scores + weights


def _pick_batch_tile(B, S, n_inputs):
    """Batch tile: ~1024 rows per step (HBM roofline), bounded by VMEM budget,
    with >= 2 grid steps when B > 1 so both v7x TensorCores get work."""
    bt = max(1, min(B, pl.cdiv(1024, S)))
    while bt > 1 and _vmem_bytes(bt, S, n_inputs) > (20 << 20):
        bt -= 1
    if B > 1 and pl.cdiv(B, bt) < 2:
        bt = pl.cdiv(B, 2)
    return bt


def _prep_weights(params):
    """Pre-transpose to (D_in, D_out) (PyTorch stores (out, in)), cast to bf16
    once, and fold 1/sqrt(d_k) into the Q projection weight and bias."""
    wq_t = (params["wq"].T * _SCALE).astype(jnp.bfloat16)
    wk_t = params["wk"].T.astype(jnp.bfloat16)
    wv_t = params["wv"].T.astype(jnp.bfloat16)
    wo_t = params["wo"].T.astype(jnp.bfloat16)
    bq = (params["bq"] * _SCALE).reshape(1, D_MODEL).astype(jnp.float32)
    bk = params["bk"].reshape(1, D_MODEL).astype(jnp.float32)
    bv = params["bv"].reshape(1, D_MODEL).astype(jnp.float32)
    bo = params["bo"].reshape(1, D_MODEL).astype(jnp.float32)
    return wq_t, bq, wk_t, bk, wv_t, bv, wo_t, bo


def multi_head_attention(q, k, v, params):
    """q, k, v: (B, S, 128) float32. params: dict of projection weights/biases."""
    B, S, D = q.shape
    assert D == D_MODEL
    assert k.shape == (B, S, D) and v.shape == (B, S, D)

    self_attn = (q is k) and (k is v)
    wq_t, bq, wk_t, bk, wv_t, bv, wo_t, bo = _prep_weights(params)

    n_inputs = 1 if self_attn else 3
    bt = _pick_batch_tile(B, S, n_inputs)
    grid_b = pl.cdiv(B, bt)
    Bp = grid_b * bt

    def pad(x):
        if Bp == B:
            return x
        return jnp.pad(x, ((0, Bp - B), (0, 0), (0, 0)))

    per_block = pl.BlockSpec((bt, S, D), lambda b: (b, 0, 0))
    full_w = pl.BlockSpec((D, D), lambda b: (0, 0))
    full_b = pl.BlockSpec((1, D), lambda b: (0, 0))
    cparams = pltpu.CompilerParams(dimension_semantics=("parallel",))

    if self_attn:
        wqkv = jnp.concatenate([wq_t, wk_t, wv_t], axis=1)   # (128, 384) bf16
        bqkv = jnp.concatenate([bq, bk, bv], axis=1)          # (1, 384) f32
        out = pl.pallas_call(
            mha_self_kernel,
            out_shape=jax.ShapeDtypeStruct((Bp, S, D), q.dtype),
            grid_spec=pltpu.PrefetchScalarGridSpec(
                num_scalar_prefetch=0,
                grid=(grid_b,),
                in_specs=[per_block,
                          pl.BlockSpec((D, 3 * D), lambda b: (0, 0)),
                          pl.BlockSpec((1, 3 * D), lambda b: (0, 0)),
                          full_w, full_b],
                out_specs=per_block,
            ),
            compiler_params=cparams,
        )(pad(q), wqkv, bqkv, wo_t, bo)
    else:
        out = pl.pallas_call(
            mha_kernel,
            out_shape=jax.ShapeDtypeStruct((Bp, S, D), q.dtype),
            grid_spec=pltpu.PrefetchScalarGridSpec(
                num_scalar_prefetch=0,
                grid=(grid_b,),
                in_specs=[per_block, per_block, per_block,
                          full_w, full_b, full_w, full_b,
                          full_w, full_b, full_w, full_b],
                out_specs=per_block,
            ),
            compiler_params=cparams,
        )(pad(q), pad(k), pad(v), wq_t, bq, wk_t, bk, wv_t, bv, wo_t, bo)

    if Bp != B:
        out = out[:B]
    return out


# --------------------------------------------------------------------------
# Pure-JAX f32 reference mirroring the PyTorch forward exactly.
# --------------------------------------------------------------------------
def _reference(q, k, v, params):
    B, S, D = q.shape

    def lin(x, w, b):
        return x @ w.T + b

    Q = lin(q, params["wq"], params["bq"]).reshape(B, S, N_HEADS, D_K).transpose(0, 2, 1, 3)
    K = lin(k, params["wk"], params["bk"]).reshape(B, S, N_HEADS, D_K).transpose(0, 2, 1, 3)
    V = lin(v, params["wv"], params["bv"]).reshape(B, S, N_HEADS, D_K).transpose(0, 2, 1, 3)
    scores = jnp.einsum("bhqd,bhkd->bhqk", Q, K) / math.sqrt(D_K)
    attn = jax.nn.softmax(scores, axis=-1)
    out = jnp.einsum("bhqk,bhkd->bhqd", attn, V)
    concat = out.transpose(0, 2, 1, 3).reshape(B, S, D)
    return lin(concat, params["wo"], params["bo"])


if __name__ == "__main__":
    key = jax.random.PRNGKey(0)
    keys = jax.random.split(key, 12)

    B, S = 2, 8

    # Deterministic parameter init (PyTorch nn.Linear-like uniform bounds).
    bound = 1.0 / math.sqrt(D_MODEL)

    def u(kk, shape):
        return jax.random.uniform(kk, shape, jnp.float32, -bound, bound)

    params = {
        "wq": u(keys[0], (D_MODEL, D_MODEL)), "bq": u(keys[1], (D_MODEL,)),
        "wk": u(keys[2], (D_MODEL, D_MODEL)), "bk": u(keys[3], (D_MODEL,)),
        "wv": u(keys[4], (D_MODEL, D_MODEL)), "bv": u(keys[5], (D_MODEL,)),
        "wo": u(keys[6], (D_MODEL, D_MODEL)), "bo": u(keys[7], (D_MODEL,)),
    }

    q = jax.random.normal(keys[8], (B, S, D_MODEL), jnp.float32)
    k = jax.random.normal(keys[9], (B, S, D_MODEL), jnp.float32)
    v = jax.random.normal(keys[10], (B, S, D_MODEL), jnp.float32)

    # General (cross-attention) path.
    out = multi_head_attention(q, k, v, params)
    out = jax.block_until_ready(out)
    ref = _reference(q, k, v, params)
    assert out.shape == (B, S, D_MODEL)
    # Tolerance loosened vs. the f32 reference: bf16 MXU operands (f32 acc)
    # and approx reciprocal in the softmax denominator.
    assert jnp.allclose(out, ref, atol=3e-2, rtol=3e-2), "mismatch (general path)"

    # Self-attention fast path (q is k is v): fused (128, 384) QKV projection.
    out_self = multi_head_attention(q, q, q, params)
    out_self = jax.block_until_ready(out_self)
    ref_self = _reference(q, q, q, params)
    assert jnp.allclose(out_self, ref_self, atol=3e-2, rtol=3e-2), "mismatch (self path)"

    print("KERNEL_OK")
</pallas_src>

<mosaic_0001>
module attributes {stable_mosaic.version = 11 : i64} {
  func.func @mha_kernel(%arg0: i32, %arg1: memref<1x8x128xf32, #tpu.memory_space<vmem>>, %arg2: memref<1x8x128xf32, #tpu.memory_space<vmem>>, %arg3: memref<1x8x128xf32, #tpu.memory_space<vmem>>, %arg4: memref<128x128xbf16, #tpu.memory_space<vmem>>, %arg5: memref<1x128xf32, #tpu.memory_space<vmem>>, %arg6: memref<128x128xbf16, #tpu.memory_space<vmem>>, %arg7: memref<1x128xf32, #tpu.memory_space<vmem>>, %arg8: memref<128x128xbf16, #tpu.memory_space<vmem>>, %arg9: memref<1x128xf32, #tpu.memory_space<vmem>>, %arg10: memref<128x128xbf16, #tpu.memory_space<vmem>>, %arg11: memref<1x128xf32, #tpu.memory_space<vmem>>, %arg12: memref<1x8x128xf32, #tpu.memory_space<vmem>>) attributes {dimension_semantics = [#tpu.dimension_semantics<parallel>], iteration_bounds = array<i64: 2>, scalar_prefetch = 0 : i64, scratch_operands = 0 : i64, tpu.core_type = #tpu.core_type<tc>, window_params = [{transform_indices = @transform_0, window_bounds = array<i64: 1, 8, 128>}, {transform_indices = @transform_1, window_bounds = array<i64: 1, 8, 128>}, {transform_indices = @transform_2, window_bounds = array<i64: 1, 8, 128>}, {pipeline_mode = #tpu.pipeline_mode<synchronous>, transform_indices = @transform_3, window_bounds = array<i64: 128, 128>}, {pipeline_mode = #tpu.pipeline_mode<synchronous>, transform_indices = @transform_4, window_bounds = array<i64: 1, 128>}, {pipeline_mode = #tpu.pipeline_mode<synchronous>, transform_indices = @transform_5, window_bounds = array<i64: 128, 128>}, {pipeline_mode = #tpu.pipeline_mode<synchronous>, transform_indices = @transform_6, window_bounds = array<i64: 1, 128>}, {pipeline_mode = #tpu.pipeline_mode<synchronous>, transform_indices = @transform_7, window_bounds = array<i64: 128, 128>}, {pipeline_mode = #tpu.pipeline_mode<synchronous>, transform_indices = @transform_8, window_bounds = array<i64: 1, 128>}, {pipeline_mode = #tpu.pipeline_mode<synchronous>, transform_indices = @transform_9, window_bounds = array<i64: 128, 128>}, {pipeline_mode = #tpu.pipeline_mode<synchronous>, transform_indices = @transform_10, window_bounds = array<i64: 1, 128>}, {transform_indices = @transform_11, window_bounds = array<i64: 1, 8, 128>}]} {
    %c0 = arith.constant 0 : index
    %c0_0 = arith.constant 0 : index
    %c0_1 = arith.constant 0 : index
    %0 = vector.load %arg1[%c0, %c0_0, %c0_1] : memref<1x8x128xf32, #tpu.memory_space<vmem>>, vector<1x8x128xf32>
    %1 = vector.shape_cast %0 : vector<1x8x128xf32> to vector<8x128xf32>
    %2 = arith.truncf %1 : vector<8x128xf32> to vector<8x128xbf16>
    %c0_2 = arith.constant 0 : index
    %c0_3 = arith.constant 0 : index
    %c0_4 = arith.constant 0 : index
    %3 = vector.load %arg2[%c0_2, %c0_3, %c0_4] : memref<1x8x128xf32, #tpu.memory_space<vmem>>, vector<1x8x128xf32>
    %4 = vector.shape_cast %3 : vector<1x8x128xf32> to vector<8x128xf32>
    %5 = arith.truncf %4 : vector<8x128xf32> to vector<8x128xbf16>
    %c0_5 = arith.constant 0 : index
    %c0_6 = arith.constant 0 : index
    %c0_7 = arith.constant 0 : index
    %6 = vector.load %arg3[%c0_5, %c0_6, %c0_7] : memref<1x8x128xf32, #tpu.memory_space<vmem>>, vector<1x8x128xf32>
    %7 = vector.shape_cast %6 : vector<1x8x128xf32> to vector<8x128xf32>
    %8 = arith.truncf %7 : vector<8x128xf32> to vector<8x128xbf16>
    %c0_8 = arith.constant 0 : index
    %c0_9 = arith.constant 0 : index
    %9 = vector.load %arg4[%c0_8, %c0_9] : memref<128x128xbf16, #tpu.memory_space<vmem>>, vector<128x128xbf16>
    %cst = arith.constant dense<0.000000e+00> : vector<8x128xf32>
    %10 = tpu.matmul %2, %9, %cst {dimension_numbers = #tpu.dot_dimension_numbers<[1], [0], [0], [1], [0, 0, 1, 1], [], []>} : vector<8x128xbf16>, vector<128x128xbf16>, vector<8x128xf32> -> vector<8x128xf32>
    %c0_10 = arith.constant 0 : index
    %c0_11 = arith.constant 0 : index
    %11 = vector.load %arg5[%c0_10, %c0_11] : memref<1x128xf32, #tpu.memory_space<vmem>>, vector<1x128xf32>
    %12 = vector.broadcast %11 : vector<1x128xf32> to vector<8x128xf32>
    %13 = arith.addf %10, %12 : vector<8x128xf32>
    %c0_12 = arith.constant 0 : index
    %c0_13 = arith.constant 0 : index
    %14 = vector.load %arg6[%c0_12, %c0_13] : memref<128x128xbf16, #tpu.memory_space<vmem>>, vector<128x128xbf16>
    %cst_14 = arith.constant dense<0.000000e+00> : vector<8x128xf32>
    %15 = tpu.matmul %5, %14, %cst_14 {dimension_numbers = #tpu.dot_dimension_numbers<[1], [0], [0], [1], [0, 0, 1, 1], [], []>} : vector<8x128xbf16>, vector<128x128xbf16>, vector<8x128xf32> -> vector<8x128xf32>
    %c0_15 = arith.constant 0 : index
    %c0_16 = arith.constant 0 : index
    %16 = vector.load %arg7[%c0_15, %c0_16] : memref<1x128xf32, #tpu.memory_space<vmem>>, vector<1x128xf32>
    %17 = vector.broadcast %16 : vector<1x128xf32> to vector<8x128xf32>
    %18 = arith.addf %15, %17 : vector<8x128xf32>
    %c0_17 = arith.constant 0 : index
    %c0_18 = arith.constant 0 : index
    %19 = vector.load %arg8[%c0_17, %c0_18] : memref<128x128xbf16, #tpu.memory_space<vmem>>, vector<128x128xbf16>
    %cst_19 = arith.constant dense<0.000000e+00> : vector<8x128xf32>
    %20 = tpu.matmul %8, %19, %cst_19 {dimension_numbers = #tpu.dot_dimension_numbers<[1], [0], [0], [1], [0, 0, 1, 1], [], []>} : vector<8x128xbf16>, vector<128x128xbf16>, vector<8x128xf32> -> vector<8x128xf32>
    %c0_20 = arith.constant 0 : index
    %c0_21 = arith.constant 0 : index
    %21 = vector.load %arg9[%c0_20, %c0_21] : memref<1x128xf32, #tpu.memory_space<vmem>>, vector<1x128xf32>
    %22 = vector.broadcast %21 : vector<1x128xf32> to vector<8x128xf32>
    %23 = arith.addf %20, %22 : vector<8x128xf32>
    %24 = vector.shape_cast %13 : vector<8x128xf32> to vector<1x8x128xf32>
    %25 = arith.truncf %24 : vector<1x8x128xf32> to vector<1x8x128xbf16>
    %26 = vector.shape_cast %18 : vector<8x128xf32> to vector<1x8x128xf32>
    %27 = arith.truncf %26 : vector<1x8x128xf32> to vector<1x8x128xbf16>
    %28 = vector.shape_cast %23 : vector<8x128xf32> to vector<1x8x128xf32>
    %29 = arith.truncf %28 : vector<1x8x128xf32> to vector<1x8x128xbf16>
    %cst_22 = arith.constant 0.000000e+00 : f32
    %30 = vector.broadcast %cst_22 : f32 to vector<8x128xf32>
    %31 = vector.extract_strided_slice %25 {offsets = [0, 0, 0], sizes = [1, 8, 32], strides = [1, 1, 1]} : vector<1x8x128xbf16> to vector<1x8x32xbf16>
    %32 = vector.extract_strided_slice %27 {offsets = [0, 0, 0], sizes = [1, 8, 32], strides = [1, 1, 1]} : vector<1x8x128xbf16> to vector<1x8x32xbf16>
    %33 = vector.extract_strided_slice %29 {offsets = [0, 0, 0], sizes = [1, 8, 32], strides = [1, 1, 1]} : vector<1x8x128xbf16> to vector<1x8x32xbf16>
    "tpu.trace_start"() <{level = 10 : i32, message = "bqd,bkd->bqk"}> : () -> ()
    %cst_23 = arith.constant dense<0.000000e+00> : vector<1x8x8xf32>
    %34 = tpu.matmul %31, %32, %cst_23 {dimension_numbers = #tpu.dot_dimension_numbers<[2], [2], [1], [1], [0, 0, 0, 1, 1, 1], [0], [0]>} : vector<1x8x32xbf16>, vector<1x8x32xbf16>, vector<1x8x8xf32> -> vector<1x8x8xf32>
    "tpu.trace_stop"() : () -> ()
    %cst_24 = arith.constant dense<0xFF800000> : vector<1x8xf32>
    %35 = vector.multi_reduction <maximumf>, %34, %cst_24 [2] : vector<1x8x8xf32> to vector<1x8xf32>
    %36 = vector.shape_cast %35 : vector<1x8xf32> to vector<1x8x1xf32>
    %37 = vector.broadcast %36 : vector<1x8x1xf32> to vector<1x8x8xf32>
    %38 = arith.subf %34, %37 : vector<1x8x8xf32>
    %39 = math.exp %38 : vector<1x8x8xf32>
    %cst_25 = arith.constant dense<0.000000e+00> : vector<1x8xf32>
    %40 = vector.multi_reduction <add>, %39, %cst_25 [2] : vector<1x8x8xf32> to vector<1x8xf32>
    %41 = vector.shape_cast %40 : vector<1x8xf32> to vector<1x8x1xf32>
    %42 = tpu.reciprocal %41 {approx = true} : vector<1x8x1xf32> -> vector<1x8x1xf32>
    %43 = vector.broadcast %42 : vector<1x8x1xf32> to vector<1x8x8xf32>
    %44 = arith.mulf %39, %43 : vector<1x8x8xf32>
    %45 = arith.truncf %44 : vector<1x8x8xf32> to vector<1x8x8xbf16>
    "tpu.trace_start"() <{level = 10 : i32, message = "bqk,bkd->bqd"}> : () -> ()
    %cst_26 = arith.constant dense<0.000000e+00> : vector<1x8x32xf32>
    %46 = tpu.matmul %45, %33, %cst_26 {dimension_numbers = #tpu.dot_dimension_numbers<[2], [1], [1], [2], [0, 0, 0, 1, 1, 2], [0], [0]>} : vector<1x8x8xbf16>, vector<1x8x32xbf16>, vector<1x8x32xf32> -> vector<1x8x32xf32>
    "tpu.trace_stop"() : () -> ()
    %47 = vector.shape_cast %46 : vector<1x8x32xf32> to vector<8x32xf32>
    %48 = arith.truncf %47 : vector<8x32xf32> to vector<8x32xbf16>
    %c0_27 = arith.constant 0 : index
    %c0_28 = arith.constant 0 : index
    %49 = vector.load %arg10[%c0_27, %c0_28] : memref<128x128xbf16, #tpu.memory_space<vmem>>, vector<32x128xbf16>
    %cst_29 = arith.constant dense<0.000000e+00> : vector<8x128xf32>
    %50 = tpu.matmul %48, %49, %cst_29 {dimension_numbers = #tpu.dot_dimension_numbers<[1], [0], [0], [1], [0, 0, 1, 1], [], []>} : vector<8x32xbf16>, vector<32x128xbf16>, vector<8x128xf32> -> vector<8x128xf32>
    %51 = arith.addf %30, %50 : vector<8x128xf32>
    %52 = vector.extract_strided_slice %25 {offsets = [0, 0, 32], sizes = [1, 8, 32], strides = [1, 1, 1]} : vector<1x8x128xbf16> to vector<1x8x32xbf16>
    %53 = vector.extract_strided_slice %27 {offsets = [0, 0, 32], sizes = [1, 8, 32], strides = [1, 1, 1]} : vector<1x8x128xbf16> to vector<1x8x32xbf16>
    %54 = vector.extract_strided_slice %29 {offsets = [0, 0, 32], sizes = [1, 8, 32], strides = [1, 1, 1]} : vector<1x8x128xbf16> to vector<1x8x32xbf16>
    "tpu.trace_start"() <{level = 10 : i32, message = "bqd,bkd->bqk"}> : () -> ()
    %cst_30 = arith.constant dense<0.000000e+00> : vector<1x8x8xf32>
    %55 = tpu.matmul %52, %53, %cst_30 {dimension_numbers = #tpu.dot_dimension_numbers<[2], [2], [1], [1], [0, 0, 0, 1, 1, 1], [0], [0]>} : vector<1x8x32xbf16>, vector<1x8x32xbf16>, vector<1x8x8xf32> -> vector<1x8x8xf32>
    "tpu.trace_stop"() : () -> ()
    %cst_31 = arith.constant dense<0xFF800000> : vector<1x8xf32>
    %56 = vector.multi_reduction <maximumf>, %55, %cst_31 [2] : vector<1x8x8xf32> to vector<1x8xf32>
    %57 = vector.shape_cast %56 : vector<1x8xf32> to vector<1x8x1xf32>
    %58 = vector.broadcast %57 : vector<1x8x1xf32> to vector<1x8x8xf32>
    %59 = arith.subf %55, %58 : vector<1x8x8xf32>
    %60 = math.exp %59 : vector<1x8x8xf32>
    %cst_32 = arith.constant dense<0.000000e+00> : vector<1x8xf32>
    %61 = vector.multi_reduction <add>, %60, %cst_32 [2] : vector<1x8x8xf32> to vector<1x8xf32>
    %62 = vector.shape_cast %61 : vector<1x8xf32> to vector<1x8x1xf32>
    %63 = tpu.reciprocal %62 {approx = true} : vector<1x8x1xf32> -> vector<1x8x1xf32>
    %64 = vector.broadcast %63 : vector<1x8x1xf32> to vector<1x8x8xf32>
    %65 = arith.mulf %60, %64 : vector<1x8x8xf32>
    %66 = arith.truncf %65 : vector<1x8x8xf32> to vector<1x8x8xbf16>
    "tpu.trace_start"() <{level = 10 : i32, message = "bqk,bkd->bqd"}> : () -> ()
    %cst_33 = arith.constant dense<0.000000e+00> : vector<1x8x32xf32>
    %67 = tpu.matmul %66, %54, %cst_33 {dimension_numbers = #tpu.dot_dimension_numbers<[2], [1], [1], [2], [0, 0, 0, 1, 1, 2], [0], [0]>} : vector<1x8x8xbf16>, vector<1x8x32xbf16>, vector<1x8x32xf32> -> vector<1x8x32xf32>
    "tpu.trace_stop"() : () -> ()
    %68 = vector.shape_cast %67 : vector<1x8x32xf32> to vector<8x32xf32>
    %69 = arith.truncf %68 : vector<8x32xf32> to vector<8x32xbf16>
    %c32 = arith.constant 32 : index
    %c0_34 = arith.constant 0 : index
    %70 = vector.load %arg10[%c32, %c0_34] : memref<128x128xbf16, #tpu.memory_space<vmem>>, vector<32x128xbf16>
    %cst_35 = arith.constant dense<0.000000e+00> : vector<8x128xf32>
    %71 = tpu.matmul %69, %70, %cst_35 {dimension_numbers = #tpu.dot_dimension_numbers<[1], [0], [0], [1], [0, 0, 1, 1], [], []>} : vector<8x32xbf16>, vector<32x128xbf16>, vector<8x128xf32> -> vector<8x128xf32>
    %72 = arith.addf %51, %71 : vector<8x128xf32>
    %73 = vector.extract_strided_slice %25 {offsets = [0, 0, 64], sizes = [1, 8, 32], strides = [1, 1, 1]} : vector<1x8x128xbf16> to vector<1x8x32xbf16>
    %74 = vector.extract_strided_slice %27 {offsets = [0, 0, 64], sizes = [1, 8, 32], strides = [1, 1, 1]} : vector<1x8x128xbf16> to vector<1x8x32xbf16>
    %75 = vector.extract_strided_slice %29 {offsets = [0, 0, 64], sizes = [1, 8, 32], strides = [1, 1, 1]} : vector<1x8x128xbf16> to vector<1x8x32xbf16>
    "tpu.trace_start"() <{level = 10 : i32, message = "bqd,bkd->bqk"}> : () -> ()
    %cst_36 = arith.constant dense<0.000000e+00> : vector<1x8x8xf32>
    %76 = tpu.matmul %73, %74, %cst_36 {dimension_numbers = #tpu.dot_dimension_numbers<[2], [2], [1], [1], [0, 0, 0, 1, 1, 1], [0], [0]>} : vector<1x8x32xbf16>, vector<1x8x32xbf16>, vector<1x8x8xf32> -> vector<1x8x8xf32>
    "tpu.trace_stop"() : () -> ()
    %cst_37 = arith.constant dense<0xFF800000> : vector<1x8xf32>
    %77 = vector.multi_reduction <maximumf>, %76, %cst_37 [2] : vector<1x8x8xf32> to vector<1x8xf32>
    %78 = vector.shape_cast %77 : vector<1x8xf32> to vector<1x8x1xf32>
    %79 = vector.broadcast %78 : vector<1x8x1xf32> to vector<1x8x8xf32>
    %80 = arith.subf %76, %79 : vector<1x8x8xf32>
    %81 = math.exp %80 : vector<1x8x8xf32>
    %cst_38 = arith.constant dense<0.000000e+00> : vector<1x8xf32>
    %82 = vector.multi_reduction <add>, %81, %cst_38 [2] : vector<1x8x8xf32> to vector<1x8xf32>
    %83 = vector.shape_cast %82 : vector<1x8xf32> to vector<1x8x1xf32>
    %84 = tpu.reciprocal %83 {approx = true} : vector<1x8x1xf32> -> vector<1x8x1xf32>
    %85 = vector.broadcast %84 : vector<1x8x1xf32> to vector<1x8x8xf32>
    %86 = arith.mulf %81, %85 : vector<1x8x8xf32>
    %87 = arith.truncf %86 : vector<1x8x8xf32> to vector<1x8x8xbf16>
    "tpu.trace_start"() <{level = 10 : i32, message = "bqk,bkd->bqd"}> : () -> ()
    %cst_39 = arith.constant dense<0.000000e+00> : vector<1x8x32xf32>
    %88 = tpu.matmul %87, %75, %cst_39 {dimension_numbers = #tpu.dot_dimension_numbers<[2], [1], [1], [2], [0, 0, 0, 1, 1, 2], [0], [0]>} : vector<1x8x8xbf16>, vector<1x8x32xbf16>, vector<1x8x32xf32> -> vector<1x8x32xf32>
    "tpu.trace_stop"() : () -> ()
    %89 = vector.shape_cast %88 : vector<1x8x32xf32> to vector<8x32xf32>
    %90 = arith.truncf %89 : vector<8x32xf32> to vector<8x32xbf16>
    %c64 = arith.constant 64 : index
    %c0_40 = arith.constant 0 : index
    %91 = vector.load %arg10[%c64, %c0_40] : memref<128x128xbf16, #tpu.memory_space<vmem>>, vector<32x128xbf16>
    %cst_41 = arith.constant dense<0.000000e+00> : vector<8x128xf32>
    %92 = tpu.matmul %90, %91, %cst_41 {dimension_numbers = #tpu.dot_dimension_numbers<[1], [0], [0], [1], [0, 0, 1, 1], [], []>} : vector<8x32xbf16>, vector<32x128xbf16>, vector<8x128xf32> -> vector<8x128xf32>
    %93 = arith.addf %72, %92 : vector<8x128xf32>
    %94 = vector.extract_strided_slice %25 {offsets = [0, 0, 96], sizes = [1, 8, 32], strides = [1, 1, 1]} : vector<1x8x128xbf16> to vector<1x8x32xbf16>
    %95 = vector.extract_strided_slice %27 {offsets = [0, 0, 96], sizes = [1, 8, 32], strides = [1, 1, 1]} : vector<1x8x128xbf16> to vector<1x8x32xbf16>
    %96 = vector.extract_strided_slice %29 {offsets = [0, 0, 96], sizes = [1, 8, 32], strides = [1, 1, 1]} : vector<1x8x128xbf16> to vector<1x8x32xbf16>
    "tpu.trace_start"() <{level = 10 : i32, message = "bqd,bkd->bqk"}> : () -> ()
    %cst_42 = arith.constant dense<0.000000e+00> : vector<1x8x8xf32>
    %97 = tpu.matmul %94, %95, %cst_42 {dimension_numbers = #tpu.dot_dimension_numbers<[2], [2], [1], [1], [0, 0, 0, 1, 1, 1], [0], [0]>} : vector<1x8x32xbf16>, vector<1x8x32xbf16>, vector<1x8x8xf32> -> vector<1x8x8xf32>
    "tpu.trace_stop"() : () -> ()
    %cst_43 = arith.constant dense<0xFF800000> : vector<1x8xf32>
    %98 = vector.multi_reduction <maximumf>, %97, %cst_43 [2] : vector<1x8x8xf32> to vector<1x8xf32>
    %99 = vector.shape_cast %98 : vector<1x8xf32> to vector<1x8x1xf32>
    %100 = vector.broadcast %99 : vector<1x8x1xf32> to vector<1x8x8xf32>
    %101 = arith.subf %97, %100 : vector<1x8x8xf32>
    %102 = math.exp %101 : vector<1x8x8xf32>
    %cst_44 = arith.constant dense<0.000000e+00> : vector<1x8xf32>
    %103 = vector.multi_reduction <add>, %102, %cst_44 [2] : vector<1x8x8xf32> to vector<1x8xf32>
    %104 = vector.shape_cast %103 : vector<1x8xf32> to vector<1x8x1xf32>
    %105 = tpu.reciprocal %104 {approx = true} : vector<1x8x1xf32> -> vector<1x8x1xf32>
    %106 = vector.broadcast %105 : vector<1x8x1xf32> to vector<1x8x8xf32>
    %107 = arith.mulf %102, %106 : vector<1x8x8xf32>
    %108 = arith.truncf %107 : vector<1x8x8xf32> to vector<1x8x8xbf16>
    "tpu.trace_start"() <{level = 10 : i32, message = "bqk,bkd->bqd"}> : () -> ()
    %cst_45 = arith.constant dense<0.000000e+00> : vector<1x8x32xf32>
    %109 = tpu.matmul %108, %96, %cst_45 {dimension_numbers = #tpu.dot_dimension_numbers<[2], [1], [1], [2], [0, 0, 0, 1, 1, 2], [0], [0]>} : vector<1x8x8xbf16>, vector<1x8x32xbf16>, vector<1x8x32xf32> -> vector<1x8x32xf32>
    "tpu.trace_stop"() : () -> ()
    %110 = vector.shape_cast %109 : vector<1x8x32xf32> to vector<8x32xf32>
    %111 = arith.truncf %110 : vector<8x32xf32> to vector<8x32xbf16>
    %c96 = arith.constant 96 : index
    %c0_46 = arith.constant 0 : index
    %112 = vector.load %arg10[%c96, %c0_46] : memref<128x128xbf16, #tpu.memory_space<vmem>>, vector<32x128xbf16>
    %cst_47 = arith.constant dense<0.000000e+00> : vector<8x128xf32>
    %113 = tpu.matmul %111, %112, %cst_47 {dimension_numbers = #tpu.dot_dimension_numbers<[1], [0], [0], [1], [0, 0, 1, 1], [], []>} : vector<8x32xbf16>, vector<32x128xbf16>, vector<8x128xf32> -> vector<8x128xf32>
    %114 = arith.addf %93, %113 : vector<8x128xf32>
    %c0_48 = arith.constant 0 : index
    %c0_49 = arith.constant 0 : index
    %115 = vector.load %arg11[%c0_48, %c0_49] : memref<1x128xf32, #tpu.memory_space<vmem>>, vector<1x128xf32>
    %116 = vector.broadcast %115 : vector<1x128xf32> to vector<8x128xf32>
    %117 = arith.addf %114, %116 : vector<8x128xf32>
    %118 = vector.shape_cast %117 : vector<8x128xf32> to vector<1x8x128xf32>
    %c0_50 = arith.constant 0 : index
    %c0_51 = arith.constant 0 : index
    %c0_52 = arith.constant 0 : index
    %119 = vector.load %arg12[%c0_50, %c0_51, %c0_52] : memref<1x8x128xf32, #tpu.memory_space<vmem>>, vector<1x8x128xf32>
    tpu.vector_store %arg12[%c0_50, %c0_51, %c0_52], %118 {strides = array<i32>} : memref<1x8x128xf32, #tpu.memory_space<vmem>>, vector<1x8x128xf32>,
    return
  }
  func.func @transform_0(%arg0: i32) -> (i32, i32, i32) {
    %c0_i32 = arith.constant 0 : i32
    %c0_i32_0 = arith.constant 0 : i32
    %c0_i32_1 = arith.constant 0 : i32
    return %arg0, %c0_i32, %c0_i32_0 : i32, i32, i32
  }
  func.func @transform_1(%arg0: i32) -> (i32, i32, i32) {
    %c0_i32 = arith.constant 0 : i32
    %c0_i32_0 = arith.constant 0 : i32
    %c0_i32_1 = arith.constant 0 : i32
    return %arg0, %c0_i32, %c0_i32_0 : i32, i32, i32
  }
  func.func @transform_2(%arg0: i32) -> (i32, i32, i32) {
    %c0_i32 = arith.constant 0 : i32
    %c0_i32_0 = arith.constant 0 : i32
    %c0_i32_1 = arith.constant 0 : i32
    return %arg0, %c0_i32, %c0_i32_0 : i32, i32, i32
  }
  func.func @transform_3(%arg0: i32) -> (i32, i32) {
    %c0_i32 = arith.constant 0 : i32
    %c0_i32_0 = arith.constant 0 : i32
    %c0_i32_1 = arith.constant 0 : i32
    return %c0_i32, %c0_i32_0 : i32, i32
  }
  func.func @transform_4(%arg0: i32) -> (i32, i32) {
    %c0_i32 = arith.constant 0 : i32
    %c0_i32_0 = arith.constant 0 : i32
    %c0_i32_1 = arith.constant 0 : i32
    return %c0_i32, %c0_i32_0 : i32, i32
  }
  func.func @transform_5(%arg0: i32) -> (i32, i32) {
    %c0_i32 = arith.constant 0 : i32
    %c0_i32_0 = arith.constant 0 : i32
    %c0_i32_1 = arith.constant 0 : i32
    return %c0_i32, %c0_i32_0 : i32, i32
  }
  func.func @transform_6(%arg0: i32) -> (i32, i32) {
    %c0_i32 = arith.constant 0 : i32
    %c0_i32_0 = arith.constant 0 : i32
    %c0_i32_1 = arith.constant 0 : i32
    return %c0_i32, %c0_i32_0 : i32, i32
  }
  func.func @transform_7(%arg0: i32) -> (i32, i32) {
    %c0_i32 = arith.constant 0 : i32
    %c0_i32_0 = arith.constant 0 : i32
    %c0_i32_1 = arith.constant 0 : i32
    return %c0_i32, %c0_i32_0 : i32, i32
  }
  func.func @transform_8(%arg0: i32) -> (i32, i32) {
    %c0_i32 = arith.constant 0 : i32
    %c0_i32_0 = arith.constant 0 : i32
    %c0_i32_1 = arith.constant 0 : i32
    return %c0_i32, %c0_i32_0 : i32, i32
  }
  func.func @transform_9(%arg0: i32) -> (i32, i32) {
    %c0_i32 = arith.constant 0 : i32
    %c0_i32_0 = arith.constant 0 : i32
    %c0_i32_1 = arith.constant 0 : i32
    return %c0_i32, %c0_i32_0 : i32, i32
  }
  func.func @transform_10(%arg0: i32) -> (i32, i32) {
    %c0_i32 = arith.constant 0 : i32
    %c0_i32_0 = arith.constant 0 : i32
    %c0_i32_1 = arith.constant 0 : i32
    return %c0_i32, %c0_i32_0 : i32, i32
  }
  func.func @transform_11(%arg0: i32) -> (i32, i32, i32) {
    %c0_i32 = arith.constant 0 : i32
    %c0_i32_0 = arith.constant 0 : i32
    %c0_i32_1 = arith.constant 0 : i32
    return %arg0, %c0_i32, %c0_i32_0 : i32, i32, i32
  }
}

</mosaic_0001>

<llo_original>
// kernel: tpu_custom_call.1
$region0: #{tpu_custom_call.1}
  #allocation0 [shape = 'u32[]', space=smem, size = 0x4, offset = 0x4, fixed_abs, tag = 'smem constant byte address 0x4 - core index']
  #allocation1 [shape = 'u32[144,128]{1,0:T(1,128)}', space=vmem, size = 0x12000, scoped, tag = 'internal scratch']
  %s0 = inlined_call_operand.hbm [shape: f32[2,8,128], index: 0, kind: input, shape index: {}]
  %s1 = inlined_call_operand.hbm [shape: f32[2,8,128], index: 1, kind: input, shape index: {}]
  %s2 = inlined_call_operand.hbm [shape: f32[2,8,128], index: 2, kind: input, shape index: {}]
  %s3 = inlined_call_operand.hbm [shape: bf16[128,128], index: 3, kind: input, shape index: {}]
  %s4 = inlined_call_operand.vmem [shape: f32[1,128], index: 4, kind: input, shape index: {}]
  %s5 = inlined_call_operand.hbm [shape: bf16[128,128], index: 5, kind: input, shape index: {}]
  %s6 = inlined_call_operand.vmem [shape: f32[1,128], index: 6, kind: input, shape index: {}]
  %s7 = inlined_call_operand.hbm [shape: bf16[128,128], index: 7, kind: input, shape index: {}]
  %s8 = inlined_call_operand.vmem [shape: f32[1,128], index: 8, kind: input, shape index: {}]
  %s9 = inlined_call_operand.hbm [shape: bf16[128,128], index: 9, kind: input, shape index: {}]
  %s10 = inlined_call_operand.vmem [shape: f32[1,128], index: 10, kind: input, shape index: {}]
  %s11 = inlined_call_operand.hbm [shape: f32[2,8,128], index: 11, kind: output, shape index: {}]
  %s12 = sld [smem:[#allocation0]]
  $region105: #{tpu_custom_call.1} parent=0
    _
  %s14 = ssub.s32 1, %s12
  %s15 = scalar_select 0, %s14, %s12
  $region1: #{tpu_custom_call.1} parent=0
    #allocation2 [shape = 'u8[8192]{0}', space=vmem, size = 0x2000, scoped, tag = 'input window, operand 0']
    #allocation3 [shape = 's32[2]{0}', space=sflag, size = 0x8, scoped, tag = 'scoped memory for tpu_custom_call.1']
    #allocation4 [shape = 's32[2]{0}', space=sflag, size = 0x8, scoped, tag = 'scoped memory for tpu_custom_call.1']
    #allocation5 [shape = 'u8[8192]{0}', space=vmem, size = 0x2000, scoped, tag = 'input window, operand 1']
    #allocation6 [shape = 's32[2]{0}', space=sflag, size = 0x8, scoped, tag = 'scoped memory for tpu_custom_call.1']
    #allocation7 [shape = 'u8[8192]{0}', space=vmem, size = 0x2000, scoped, tag = 'input window, operand 2']
    #allocation8 [shape = 'u8[32768]{0}', space=vmem, size = 0x8000, scoped, tag = 'input window, operand 3, single buffered']
    #allocation9 [shape = 's32[1]{0}', space=sflag, size = 0x4, scoped, tag = 'scoped memory for tpu_custom_call.1']
    #allocation10 [shape = 'u8[32768]{0}', space=vmem, size = 0x8000, scoped, tag = 'input window, operand 5, single buffered']
    #allocation11 [shape = 'u8[32768]{0}', space=vmem, size = 0x8000, scoped, tag = 'input window, operand 7, single buffered']
    #allocation12 [shape = 's32[1]{0}', space=sflag, size = 0x4, scoped, tag = 'scoped memory for tpu_custom_call.1']
    #allocation13 [shape = 'u8[32768]{0}', space=vmem, size = 0x8000, scoped, tag = 'input window, operand 9, single buffered']
    #allocation14 [shape = 'u8[8192]{0}', space=vmem, size = 0x2000, scoped, tag = 'output window, operand 0']
    %16 = vsyncpa [#allocation3], 0
    %s17 = scalar_lea.sflag [#allocation3], 1
    %18 = vsyncpa %s17, 0
    %19 = vsyncpa [#allocation6], 0
    %s20 = scalar_lea.sflag [#allocation6], 1
    %21 = vsyncpa %s20, 0
    %22 = vsyncpa [#allocation9], 0
    %23 = vsyncpa [#allocation12], 0
    %24 = vsyncpa [#allocation4], 0
    %s25 = scalar_lea.sflag [#allocation4], 1
    %26 = vsyncpa %s25, 0
    loop: start=0, step=1, limit=4
    $region2: #{tpu_custom_call.1} parent=1 // loop_pre_header
      _
    $region3: #{tpu_custom_call.1} parent=1 // loop_header
      %s28 = sphi 0, %s32
      %p29 = scmp.ge.s32.totalorder %s28, 4
      %s38 = sphi 0, %s40
      %s41 = sphi 0, %s38
      %s42 = sphi 0, %s41
      %s58 = sphi 0, %s42
      %s64 = sphi 0, %s66
      %s67 = sphi 0, %s64
      %s68 = sphi 0, %s67
      %s84 = sphi 0, %s68
      %s90 = sphi 0, %s92
      %s93 = sphi 0, %s90
      %s94 = sphi 0, %s93
      %s110 = sphi 0, %s94
      %s114 = sphi 0, %s114
      %s116 = sphi 0, %s114
      %s117 = sphi 0, %s116
      %s131 = sphi 0, %s117
      %s135 = sphi 0, %s135
      %s137 = sphi 0, %s135
      %s138 = sphi 0, %s137
      %s152 = sphi 0, %s138
      %s156 = sphi 0, %s156
      %s158 = sphi 0, %s156
      %s159 = sphi 0, %s158
      %s173 = sphi 0, %s159
      %s177 = sphi 0, %s177
      %s179 = sphi 0, %s177
      %s180 = sphi 0, %s179
      %s194 = sphi 0, %s180
      %s198 = sphi 0, %s198
      %s200 = sphi 0, %s198
      %s201 = sphi 0, %s200
      %s215 = sphi 0, %s201
      %s219 = sphi 0, %s219
      %s221 = sphi 0, %s219
      %s222 = sphi 0, %s221
      %s236 = sphi 0, %s222
      %s240 = sphi 0, %s240
      %s242 = sphi 0, %s240
      %s243 = sphi 0, %s242
      %s257 = sphi 0, %s243
      %s261 = sphi 0, %s261
      %s263 = sphi 0, %s261
      %s264 = sphi 0, %s263
      %s278 = sphi 0, %s264
      %s284 = sphi 0, %s286
      %s287 = sphi 0, %s284
      %s288 = sphi 0, %s287
      %s304 = sphi 0, %s288
    $region4: #{tpu_custom_call.1} parent=1 // loop_header_branch
      %31 = sbr.rel (%p29) target = $region8
    $region5: #{tpu_custom_call.1} parent=1 // loop_body
      %s33 = ssub.s32 %s28, 1
      %s34 = ssub.s32 %s28, 2
      %s35 = sadd.s32 %s28, 1
      %s36 = ssub.s32 %s28, %s35
      %p37 = scmp.eq.s32.totalorder %s36, 0
      %s39 = sadd.s32 %s38, 1
      %s40 = scalar_select %p37, %s38, %s39
      %p43 = pneg %p37
      %p44 = scmp.eq.s32.totalorder %s28, 1
      %p45 = por %p43, %p44
      %p46 = scmp.ne.s32.totalorder %s38, %s41
      %p47 = scmp.eq.s32.totalorder %s28, 0
      %p48 = por %p46, %p47
      %p49 = scmp.ne.s32.totalorder %s38, %s41
      %p50 = scmp.eq.s32.totalorder %s33, 1
      %p51 = por %p49, %p50
      %p52 = scmp.ne.s32.totalorder %s41, %s42
      %p53 = scmp.eq.s32.totalorder %s33, 0
      %p54 = por %p52, %p53
      %p55 = scmp.ne.s32.totalorder %s41, %s42
      %p56 = scmp.eq.s32.totalorder %s34, 1
      %p57 = por %p55, %p56
      %p59 = scmp.ne.s32.totalorder %s42, %s58
      %p60 = scmp.eq.s32.totalorder %s34, 0
      %p61 = por %p59, %p60
      %s62 = ssub.s32 %s28, %s35
      %p63 = scmp.eq.s32.totalorder %s62, 0
      %s65 = sadd.s32 %s64, 1
      %s66 = scalar_select %p63, %s64, %s65
      %p69 = pneg %p63
      %p70 = scmp.eq.s32.totalorder %s28, 1
      %p71 = por %p69, %p70
      %p72 = scmp.ne.s32.totalorder %s64, %s67
      %p73 = scmp.eq.s32.totalorder %s28, 0
      %p74 = por %p72, %p73
      %p75 = scmp.ne.s32.totalorder %s64, %s67
      %p76 = scmp.eq.s32.totalorder %s33, 1
      %p77 = por %p75, %p76
      %p78 = scmp.ne.s32.totalorder %s67, %s68
      %p79 = scmp.eq.s32.totalorder %s33, 0
      %p80 = por %p78, %p79
      %p81 = scmp.ne.s32.totalorder %s67, %s68
      %p82 = scmp.eq.s32.totalorder %s34, 1
      %p83 = por %p81, %p82
      %p85 = scmp.ne.s32.totalorder %s68, %s84
      %p86 = scmp.eq.s32.totalorder %s34, 0
      %p87 = por %p85, %p86
      %s88 = ssub.s32 %s28, %s35
      %p89 = scmp.eq.s32.totalorder %s88, 0
      %s91 = sadd.s32 %s90, 1
      %s92 = scalar_select %p89, %s90, %s91
      %p95 = pneg %p89
      %p96 = scmp.eq.s32.totalorder %s28, 1
      %p97 = por %p95, %p96
      %p98 = scmp.ne.s32.totalorder %s90, %s93
      %p99 = scmp.eq.s32.totalorder %s28, 0
      %p100 = por %p98, %p99
      %p101 = scmp.ne.s32.totalorder %s90, %s93
      %p102 = scmp.eq.s32.totalorder %s33, 1
      %p103 = por %p101, %p102
      %p104 = scmp.ne.s32.totalorder %s93, %s94
      %p105 = scmp.eq.s32.totalorder %s33, 0
      %p106 = por %p104, %p105
      %p107 = scmp.ne.s32.totalorder %s93, %s94
      %p108 = scmp.eq.s32.totalorder %s34, 1
      %p109 = por %p107, %p108
      %p111 = scmp.ne.s32.totalorder %s94, %s110
      %p112 = scmp.eq.s32.totalorder %s34, 0
      %p113 = por %p111, %p112
      %s115 = sadd.s32 %s114, 1
      %p118 = scmp.eq.s32.totalorder %s28, 1
      %p119 = scmp.ne.s32.totalorder %s114, %s116
      %p120 = scmp.eq.s32.totalorder %s28, 0
      %p121 = por %p119, %p120
      %p122 = scmp.ne.s32.totalorder %s114, %s116
      %p123 = scmp.eq.s32.totalorder %s33, 1
      %p124 = por %p122, %p123
      %p125 = scmp.ne.s32.totalorder %s116, %s117
      %p126 = scmp.eq.s32.totalorder %s33, 0
      %p127 = por %p125, %p126
      %p128 = scmp.ne.s32.totalorder %s116, %s117
      %p129 = scmp.eq.s32.totalorder %s34, 1
      %p130 = por %p128, %p129
      %p132 = scmp.ne.s32.totalorder %s117, %s131
      %p133 = scmp.eq.s32.totalorder %s34, 0
      %p134 = por %p132, %p133
      %s136 = sadd.s32 %s135, 1
      %p139 = scmp.eq.s32.totalorder %s28, 1
      %p140 = scmp.ne.s32.totalorder %s135, %s137
      %p141 = scmp.eq.s32.totalorder %s28, 0
      %p142 = por %p140, %p141
      %p143 = scmp.ne.s32.totalorder %s135, %s137
      %p144 = scmp.eq.s32.totalorder %s33, 1
      %p145 = por %p143, %p144
      %p146 = scmp.ne.s32.totalorder %s137, %s138
      %p147 = scmp.eq.s32.totalorder %s33, 0
      %p148 = por %p146, %p147
      %p149 = scmp.ne.s32.totalorder %s137, %s138
      %p150 = scmp.eq.s32.totalorder %s34, 1
      %p151 = por %p149, %p150
      %p153 = scmp.ne.s32.totalorder %s138, %s152
      %p154 = scmp.eq.s32.totalorder %s34, 0
      %p155 = por %p153, %p154
      %s157 = sadd.s32 %s156, 1
      %p160 = scmp.eq.s32.totalorder %s28, 1
      %p161 = scmp.ne.s32.totalorder %s156, %s158
      %p162 = scmp.eq.s32.totalorder %s28, 0
      %p163 = por %p161, %p162
      %p164 = scmp.ne.s32.totalorder %s156, %s158
      %p165 = scmp.eq.s32.totalorder %s33, 1
      %p166 = por %p164, %p165
      %p167 = scmp.ne.s32.totalorder %s158, %s159
      %p168 = scmp.eq.s32.totalorder %s33, 0
      %p169 = por %p167, %p168
      %p170 = scmp.ne.s32.totalorder %s158, %s159
      %p171 = scmp.eq.s32.totalorder %s34, 1
      %p172 = por %p170, %p171
      %p174 = scmp.ne.s32.totalorder %s159, %s173
      %p175 = scmp.eq.s32.totalorder %s34, 0
      %p176 = por %p174, %p175
      %s178 = sadd.s32 %s177, 1
      %p181 = scmp.eq.s32.totalorder %s28, 1
      %p182 = scmp.ne.s32.totalorder %s177, %s179
      %p183 = scmp.eq.s32.totalorder %s28, 0
      %p184 = por %p182, %p183
      %p185 = scmp.ne.s32.totalorder %s177, %s179
      %p186 = scmp.eq.s32.totalorder %s33, 1
      %p187 = por %p185, %p186
      %p188 = scmp.ne.s32.totalorder %s179, %s180
      %p189 = scmp.eq.s32.totalorder %s33, 0
      %p190 = por %p188, %p189
      %p191 = scmp.ne.s32.totalorder %s179, %s180
      %p192 = scmp.eq.s32.totalorder %s34, 1
      %p193 = por %p191, %p192
      %p195 = scmp.ne.s32.totalorder %s180, %s194
      %p196 = scmp.eq.s32.totalorder %s34, 0
      %p197 = por %p195, %p196
      %s199 = sadd.s32 %s198, 1
      %p202 = scmp.eq.s32.totalorder %s28, 1
      %p203 = scmp.ne.s32.totalorder %s198, %s200
      %p204 = scmp.eq.s32.totalorder %s28, 0
      %p205 = por %p203, %p204
      %p206 = scmp.ne.s32.totalorder %s198, %s200
      %p207 = scmp.eq.s32.totalorder %s33, 1
      %p208 = por %p206, %p207
      %p209 = scmp.ne.s32.totalorder %s200, %s201
      %p210 = scmp.eq.s32.totalorder %s33, 0
      %p211 = por %p209, %p210
      %p212 = scmp.ne.s32.totalorder %s200, %s201
      %p213 = scmp.eq.s32.totalorder %s34, 1
      %p214 = por %p212, %p213
      %p216 = scmp.ne.s32.totalorder %s201, %s215
      %p217 = scmp.eq.s32.totalorder %s34, 0
      %p218 = por %p216, %p217
      %s220 = sadd.s32 %s219, 1
      %p223 = scmp.eq.s32.totalorder %s28, 1
      %p224 = scmp.ne.s32.totalorder %s219, %s221
      %p225 = scmp.eq.s32.totalorder %s28, 0
      %p226 = por %p224, %p225
      %p227 = scmp.ne.s32.totalorder %s219, %s221
      %p228 = scmp.eq.s32.totalorder %s33, 1
      %p229 = por %p227, %p228
      %p230 = scmp.ne.s32.totalorder %s221, %s222
      %p231 = scmp.eq.s32.totalorder %s33, 0
      %p232 = por %p230, %p231
      %p233 = scmp.ne.s32.totalorder %s221, %s222
      %p234 = scmp.eq.s32.totalorder %s34, 1
      %p235 = por %p233, %p234
      %p237 = scmp.ne.s32.totalorder %s222, %s236
      %p238 = scmp.eq.s32.totalorder %s34, 0
      %p239 = por %p237, %p238
      %s241 = sadd.s32 %s240, 1
      %p244 = scmp.eq.s32.totalorder %s28, 1
      %p245 = scmp.ne.s32.totalorder %s240, %s242
      %p246 = scmp.eq.s32.totalorder %s28, 0
      %p247 = por %p245, %p246
      %p248 = scmp.ne.s32.totalorder %s240, %s242
      %p249 = scmp.eq.s32.totalorder %s33, 1
      %p250 = por %p248, %p249
      %p251 = scmp.ne.s32.totalorder %s242, %s243
      %p252 = scmp.eq.s32.totalorder %s33, 0
      %p253 = por %p251, %p252
      %p254 = scmp.ne.s32.totalorder %s242, %s243
      %p255 = scmp.eq.s32.totalorder %s34, 1
      %p256 = por %p254, %p255
      %p258 = scmp.ne.s32.totalorder %s243, %s257
      %p259 = scmp.eq.s32.totalorder %s34, 0
      %p260 = por %p258, %p259
      %s262 = sadd.s32 %s261, 1
      %p265 = scmp.eq.s32.totalorder %s28, 1
      %p266 = scmp.ne.s32.totalorder %s261, %s263
      %p267 = scmp.eq.s32.totalorder %s28, 0
      %p268 = por %p266, %p267
      %p269 = scmp.ne.s32.totalorder %s261, %s263
      %p270 = scmp.eq.s32.totalorder %s33, 1
      %p271 = por %p269, %p270
      %p272 = scmp.ne.s32.totalorder %s263, %s264
      %p273 = scmp.eq.s32.totalorder %s33, 0
      %p274 = por %p272, %p273
      %p275 = scmp.ne.s32.totalorder %s263, %s264
      %p276 = scmp.eq.s32.totalorder %s34, 1
      %p277 = por %p275, %p276
      %p279 = scmp.ne.s32.totalorder %s264, %s278
      %p280 = scmp.eq.s32.totalorder %s34, 0
      %p281 = por %p279, %p280
      %s282 = ssub.s32 %s28, %s35
      %p283 = scmp.eq.s32.totalorder %s282, 0
      %s285 = sadd.s32 %s284, 1
      %s286 = scalar_select %p283, %s284, %s285
      %p289 = pneg %p283
      %p290 = scmp.eq.s32.totalorder %s28, 1
      %p291 = por %p289, %p290
      %p292 = scmp.ne.s32.totalorder %s284, %s287
      %p293 = scmp.eq.s32.totalorder %s28, 0
      %p294 = por %p292, %p293
      %p295 = scmp.ne.s32.totalorder %s284, %s287
      %p296 = scmp.eq.s32.totalorder %s33, 1
      %p297 = por %p295, %p296
      %p298 = scmp.ne.s32.totalorder %s287, %s288
      %p299 = scmp.eq.s32.totalorder %s33, 0
      %p300 = por %p298, %p299
      %p301 = scmp.ne.s32.totalorder %s287, %s288
      %p302 = scmp.eq.s32.totalorder %s34, 1
      %p303 = por %p301, %p302
      %p305 = scmp.ne.s32.totalorder %s288, %s304
      %p306 = scmp.eq.s32.totalorder %s34, 0
      %p307 = por %p305, %p306
      %p308 = scmp.le.s32.totalorder 1, %s28
      %p309 = scmp.lt.s32.totalorder %s28, 3
      %p310 = pnand %p308, %p309
      %p311 = pneg %p310
      // Predicated region
      $region9: #{tpu_custom_call.1} parent=5 // pred_check
        _
      $region10: #{tpu_custom_call.1} parent=5 // pred_check_branch
        %313 = sbr.rel (%p310) target = $region12
      $region11: #{tpu_custom_call.1} parent=5 // pred_region
        %s314 = ssub.s32 %s28, 1
        // Predicated region
        $region13: #{tpu_custom_call.1} parent=11 // pred_check
          %p315 = pneg %p127
        $region14: #{tpu_custom_call.1} parent=11 // pred_check_branch
          %317 = sbr.rel (%p315) target = $region16
        $region15: #{tpu_custom_call.1} parent=11 // pred_region
          %s319 = ssub.s32 1024, 1024
          %320 = vsyncadd [#allocation9], %s319
          %s321 = sshll.u32 [#allocation8], 4
          %s322 = int_to_ptr.vmem [resolvable:$true] %s321
          %327 = dma.hbm_to_vmem [thread:$0]  %s3, 1024, %s322, [#allocation9], 64, 64, 4
        $region16: #{tpu_custom_call.1} parent=11 // pred_fallthru
          _
        // Predicated region
        $region17: #{tpu_custom_call.1} parent=11 // pred_check
          %p328 = pneg %p148
        $region18: #{tpu_custom_call.1} parent=11 // pred_check_branch
          %330 = sbr.rel (%p328) target = $region20
        $region19: #{tpu_custom_call.1} parent=11 // pred_region
          _
        $region20: #{tpu_custom_call.1} parent=11 // pred_fallthru
          _
        // Predicated region
        $region21: #{tpu_custom_call.1} parent=11 // pred_check
          %p331 = pneg %p169
        $region22: #{tpu_custom_call.1} parent=11 // pred_check_branch
          %333 = sbr.rel (%p331) target = $region24
        $region23: #{tpu_custom_call.1} parent=11 // pred_region
          %s335 = ssub.s32 1024, 1024
          %336 = vsyncadd [#allocation9], %s335
          %s337 = sshll.u32 [#allocation10], 4
          %s338 = int_to_ptr.vmem [resolvable:$true] %s337
          %343 = dma.hbm_to_vmem [thread:$0]  %s5, 1024, %s338, [#allocation9], 64, 64, 4
        $region24: #{tpu_custom_call.1} parent=11 // pred_fallthru
          _
        // Predicated region
        $region25: #{tpu_custom_call.1} parent=11 // pred_check
          %p344 = pneg %p190
        $region26: #{tpu_custom_call.1} parent=11 // pred_check_branch
          %346 = sbr.rel (%p344) target = $region28
        $region27: #{tpu_custom_call.1} parent=11 // pred_region
          _
        $region28: #{tpu_custom_call.1} parent=11 // pred_fallthru
          _
        // Predicated region
        $region29: #{tpu_custom_call.1} parent=11 // pred_check
          %p347 = pneg %p211
        $region30: #{tpu_custom_call.1} parent=11 // pred_check_branch
          %349 = sbr.rel (%p347) target = $region32
        $region31: #{tpu_custom_call.1} parent=11 // pred_region
          %s351 = ssub.s32 1024, 1024
          %352 = vsyncadd [#allocation12], %s351
          %s353 = sshll.u32 [#allocation11], 4
          %s354 = int_to_ptr.vmem [resolvable:$true] %s353
          %359 = dma.hbm_to_vmem [thread:$0]  %s7, 1024, %s354, [#allocation12], 64, 64, 4
        $region32: #{tpu_custom_call.1} parent=11 // pred_fallthru
          _
        // Predicated region
        $region33: #{tpu_custom_call.1} parent=11 // pred_check
          %p360 = pneg %p232
        $region34: #{tpu_custom_call.1} parent=11 // pred_check_branch
          %362 = sbr.rel (%p360) target = $region36
        $region35: #{tpu_custom_call.1} parent=11 // pred_region
          _
        $region36: #{tpu_custom_call.1} parent=11 // pred_fallthru
          _
        // Predicated region
        $region37: #{tpu_custom_call.1} parent=11 // pred_check
          %p363 = pneg %p253
        $region38: #{tpu_custom_call.1} parent=11 // pred_check_branch
          %365 = sbr.rel (%p363) target = $region40
        $region39: #{tpu_custom_call.1} parent=11 // pred_region
          %s367 = ssub.s32 1024, 1024
          %368 = vsyncadd [#allocation12], %s367
          %s369 = sshll.u32 [#allocation13], 4
          %s370 = int_to_ptr.vmem [resolvable:$true] %s369
          %375 = dma.hbm_to_vmem [thread:$0]  %s9, 1024, %s370, [#allocation12], 64, 64, 4
        $region40: #{tpu_custom_call.1} parent=11 // pred_fallthru
          _
        // Predicated region
        $region41: #{tpu_custom_call.1} parent=11 // pred_check
          %p376 = pneg %p274
        $region42: #{tpu_custom_call.1} parent=11 // pred_check_branch
          %378 = sbr.rel (%p376) target = $region44
        $region43: #{tpu_custom_call.1} parent=11 // pred_region
          _
        $region44: #{tpu_custom_call.1} parent=11 // pred_fallthru
          _
      $region12: #{tpu_custom_call.1} parent=5 // pred_fallthru
        _
      %p379 = scmp.lt.s32.totalorder %s28, 2
      // Predicated region
      $region45: #{tpu_custom_call.1} parent=5 // pred_check
        %p380 = pneg %p379
      $region46: #{tpu_custom_call.1} parent=5 // pred_check_branch
        %382 = sbr.rel (%p380) target = $region48
      $region47: #{tpu_custom_call.1} parent=5 // pred_region
        // Predicated region
        $region49: #{tpu_custom_call.1} parent=47 // pred_check
          %p383 = pneg %p48
        $region50: #{tpu_custom_call.1} parent=47 // pred_check_branch
          %385 = sbr.rel (%p383) target = $region52
        $region51: #{tpu_custom_call.1} parent=47 // pred_region
          %s386 = sand.u32 %s38, 1
          %s387 = scalar_lea.sflag [#allocation3], %s386
          %s388 = sand.u32 %s38, 1
          %s389 = smul.addr %s388, 8
          %s390 = scalar_lea.vmem [#allocation2], %s389
          %s392 = ssub.s32 128, 128
          %393 = vsyncadd %s387, %s392
          %s394 = smul.addr %s28, 128
          %s395 = scalar_lea.hbm %s0, %s394
          %s397 = sshll.u32 %s390, 4
          %s398 = int_to_ptr.vmem [resolvable:$true] %s397
          %400 = dma.hbm_to_vmem [thread:$0]  %s395, 128, %s398, %s387
        $region52: #{tpu_custom_call.1} parent=47 // pred_fallthru
          _
        // Predicated region
        $region53: #{tpu_custom_call.1} parent=47 // pred_check
          %p401 = pneg %p74
        $region54: #{tpu_custom_call.1} parent=47 // pred_check_branch
          %403 = sbr.rel (%p401) target = $region56
        $region55: #{tpu_custom_call.1} parent=47 // pred_region
          %s404 = sand.u32 %s28, 1
          %s405 = scalar_lea.sflag [#allocation6], %s404
          %s406 = sand.u32 %s64, 1
          %s407 = smul.addr %s406, 8
          %s408 = scalar_lea.vmem [#allocation5], %s407
          %s410 = ssub.s32 128, 128
          %411 = vsyncadd %s405, %s410
          %s412 = smul.addr %s28, 128
          %s413 = scalar_lea.hbm %s1, %s412
          %s415 = sshll.u32 %s408, 4
          %s416 = int_to_ptr.vmem [resolvable:$true] %s415
          %418 = dma.hbm_to_vmem [thread:$0]  %s413, 128, %s416, %s405
        $region56: #{tpu_custom_call.1} parent=47 // pred_fallthru
          _
        // Predicated region
        $region57: #{tpu_custom_call.1} parent=47 // pred_check
          %p419 = pneg %p100
        $region58: #{tpu_custom_call.1} parent=47 // pred_check_branch
          %421 = sbr.rel (%p419) target = $region60
        $region59: #{tpu_custom_call.1} parent=47 // pred_region
          %s422 = sand.u32 %s28, 1
          %s423 = scalar_lea.sflag [#allocation6], %s422
          %s424 = sand.u32 %s90, 1
          %s425 = smul.addr %s424, 8
          %s426 = scalar_lea.vmem [#allocation7], %s425
          %s428 = ssub.s32 128, 128
          %429 = vsyncadd %s423, %s428
          %s430 = smul.addr %s28, 128
          %s431 = scalar_lea.hbm %s2, %s430
          %s433 = sshll.u32 %s426, 4
          %s434 = int_to_ptr.vmem [resolvable:$true] %s433
          %436 = dma.hbm_to_vmem [thread:$0]  %s431, 128, %s434, %s423
        $region60: #{tpu_custom_call.1} parent=47 // pred_fallthru
          _
      $region48: #{tpu_custom_call.1} parent=5 // pred_fallthru
        _
      %p437 = scmp.le.s32.totalorder 1, %s28
      %p438 = scmp.lt.s32.totalorder %s28, 3
      %p439 = pnand %p437, %p438
      %p440 = pneg %p439
      // Predicated region
      $region61: #{tpu_custom_call.1} parent=5 // pred_check
        _
      $region62: #{tpu_custom_call.1} parent=5 // pred_check_branch
        %442 = sbr.rel (%p439) target = $region64
      $region63: #{tpu_custom_call.1} parent=5 // pred_region
        %s443 = ssub.s32 %s28, 1
        %s444 = sand.u32 %s41, 1
        %s445 = scalar_lea.sflag [#allocation3], %s444
        %s446 = sand.u32 %s41, 1
        %s447 = smul.addr %s446, 8
        %s448 = scalar_lea.vmem [#allocation2], %s447
        // Predicated region
        $region65: #{tpu_custom_call.1} parent=63 // pred_check
          %p449 = pneg %p54
        $region66: #{tpu_custom_call.1} parent=63 // pred_check_branch
          %451 = sbr.rel (%p449) target = $region68
        $region67: #{tpu_custom_call.1} parent=63 // pred_region
          %452 = dma.done %s445, 128
        $region68: #{tpu_custom_call.1} parent=63 // pred_fallthru
          _
        %s453 = sand.u32 %s33, 1
        %s454 = scalar_lea.sflag [#allocation6], %s453
        %s455 = sand.u32 %s67, 1
        %s456 = smul.addr %s455, 8
        %s457 = scalar_lea.vmem [#allocation5], %s456
        // Predicated region
        $region69: #{tpu_custom_call.1} parent=63 // pred_check
          %p458 = pneg %p80
        $region70: #{tpu_custom_call.1} parent=63 // pred_check_branch
          %460 = sbr.rel (%p458) target = $region72
        $region71: #{tpu_custom_call.1} parent=63 // pred_region
          %461 = dma.done %s454, 128
        $region72: #{tpu_custom_call.1} parent=63 // pred_fallthru
          _
        %s462 = sand.u32 %s33, 1
        %s463 = scalar_lea.sflag [#allocation6], %s462
        %s464 = sand.u32 %s93, 1
        %s465 = smul.addr %s464, 8
        %s466 = scalar_lea.vmem [#allocation7], %s465
        // Predicated region
        $region73: #{tpu_custom_call.1} parent=63 // pred_check
          %p467 = pneg %p106
        $region74: #{tpu_custom_call.1} parent=63 // pred_check_branch
          %469 = sbr.rel (%p467) target = $region76
        $region75: #{tpu_custom_call.1} parent=63 // pred_region
          %470 = dma.done %s463, 128
        $region76: #{tpu_custom_call.1} parent=63 // pred_fallthru
          _
        // Predicated region
        $region77: #{tpu_custom_call.1} parent=63 // pred_check
          %p471 = pneg %p127
        $region78: #{tpu_custom_call.1} parent=63 // pred_check_branch
          %473 = sbr.rel (%p471) target = $region80
        $region79: #{tpu_custom_call.1} parent=63 // pred_region
          %474 = dma.done [#allocation9], 1024
        $region80: #{tpu_custom_call.1} parent=63 // pred_fallthru
          _
        // Predicated region
        $region81: #{tpu_custom_call.1} parent=63 // pred_check
          %p475 = pneg %p169
        $region82: #{tpu_custom_call.1} parent=63 // pred_check_branch
          %477 = sbr.rel (%p475) target = $region84
        $region83: #{tpu_custom_call.1} parent=63 // pred_region
          %478 = dma.done [#allocation9], 1024
        $region84: #{tpu_custom_call.1} parent=63 // pred_fallthru
          _
        // Predicated region
        $region85: #{tpu_custom_call.1} parent=63 // pred_check
          %p479 = pneg %p211
        $region86: #{tpu_custom_call.1} parent=63 // pred_check_branch
          %481 = sbr.rel (%p479) target = $region88
        $region87: #{tpu_custom_call.1} parent=63 // pred_region
          %482 = dma.done [#allocation12], 1024
        $region88: #{tpu_custom_call.1} parent=63 // pred_fallthru
          _
        // Predicated region
        $region89: #{tpu_custom_call.1} parent=63 // pred_check
          %p483 = pneg %p253
        $region90: #{tpu_custom_call.1} parent=63 // pred_check_branch
          %485 = sbr.rel (%p483) target = $region92
        $region91: #{tpu_custom_call.1} parent=63 // pred_region
          %486 = dma.done [#allocation12], 1024
        $region92: #{tpu_custom_call.1} parent=63 // pred_fallthru
          _
        %s487 = sand.u32 %s41, 1
        %s488 = scalar_lea.sflag [#allocation3], %s487
        %s489 = sand.u32 %s41, 1
        %s490 = smul.addr %s489, 8
        %s491 = scalar_lea.vmem [#allocation2], %s490
        %p492 = pneg %p54
        %p493 = pneg %p51
        %s494 = sand.u32 %s33, 1
        %s495 = scalar_lea.sflag [#allocation6], %s494
        %s496 = sand.u32 %s67, 1
        %s497 = smul.addr %s496, 8
        %s498 = scalar_lea.vmem [#allocation5], %s497
        %p499 = pneg %p80
        %p500 = pneg %p77
        %s501 = sand.u32 %s33, 1
        %s502 = scalar_lea.sflag [#allocation6], %s501
        %s503 = sand.u32 %s93, 1
        %s504 = smul.addr %s503, 8
        %s505 = scalar_lea.vmem [#allocation7], %s504
        %p506 = pneg %p106
        %p507 = pneg %p103
        %p508 = pneg %p127
        %p509 = pneg %p124
        %p510 = pneg %p148
        %p511 = pneg %p145
        %p512 = pneg %p169
        %p513 = pneg %p166
        %p514 = pneg %p190
        %p515 = pneg %p187
        %p516 = pneg %p211
        %p517 = pneg %p208
        %p518 = pneg %p232
        %p519 = pneg %p229
        %p520 = pneg %p253
        %p521 = pneg %p250
        %p522 = pneg %p274
        %p523 = pneg %p271
        %p524 = pneg %p300
        %p525 = pneg %p297
        %s526 = sand.u32 %s287, 1
        %s527 = scalar_lea.sflag [#allocation4], %s526
        %s528 = sand.u32 %s287, 1
        %s529 = smul.addr %s528, 8
        %s530 = scalar_lea.vmem [#allocation14], %s529
        %v532 = vld [vmem:[%s448] sm:$0xff]
        %v533 = vpack.c.bf16 %v532, %v532
        %v534 = vld [vmem:[%s457] sm:$0xff]
        %v535 = vpack.c.bf16 %v534, %v534
        %v536 = vld [vmem:[%s466] sm:$0xff]
        %v537 = vpack.c.bf16 %v536, %v536
        %v538 = vld [vmem:[#allocation8] sm:$0xf]
        %v539 = vld [vmem:[#allocation8 + $0x4] sm:$0xf]
        %v540 = vld [vmem:[#allocation8 + $0x8] sm:$0xf]
        %v541 = vld [vmem:[#allocation8 + $0xc] sm:$0xf]
        %v542 = vld [vmem:[#allocation8 + $0x10] sm:$0xf]
        %v543 = vld [vmem:[#allocation8 + $0x14] sm:$0xf]
        %v544 = vld [vmem:[#allocation8 + $0x18] sm:$0xf]
        %v545 = vld [vmem:[#allocation8 + $0x1c] sm:$0xf]
        %v546 = vld [vmem:[#allocation8 + $0x20] sm:$0xf]
        %v547 = vld [vmem:[#allocation8 + $0x24] sm:$0xf]
        %v548 = vld [vmem:[#allocation8 + $0x28] sm:$0xf]
        %v549 = vld [vmem:[#allocation8 + $0x2c] sm:$0xf]
        %v550 = vld [vmem:[#allocation8 + $0x30] sm:$0xf]
        %v551 = vld [vmem:[#allocation8 + $0x34] sm:$0xf]
        %v552 = vld [vmem:[#allocation8 + $0x38] sm:$0xf]
        %v553 = vld [vmem:[#allocation8 + $0x3c] sm:$0xf]
        %v554 = vld [vmem:[%s4] sm:$0x1]
        %v556 = vlaneseq
        %v557 = vshrl.u32 %v556, 7
        %v558 = vsub.s32 0, %v557
        %v559 = vrot.slane %v554, %v558
        %v577 = vunpack.c.l.b16 %v538
        %v578 = vunpack.c.l.b16 %v539
        %v579 = vunpack.c.l.b16 %v540
        %v580 = vunpack.c.l.b16 %v541
        %v581 = vunpack.c.l.b16 %v542
        %v582 = vunpack.c.l.b16 %v543
        %v583 = vunpack.c.l.b16 %v544
        %v584 = vunpack.c.l.b16 %v545
        %v585 = vunpack.c.l.b16 %v546
        %v586 = vunpack.c.l.b16 %v547
        %v587 = vunpack.c.l.b16 %v548
        %v588 = vunpack.c.l.b16 %v549
        %v589 = vunpack.c.l.b16 %v550
        %v590 = vunpack.c.l.b16 %v551
        %v591 = vunpack.c.l.b16 %v552
        %v592 = vunpack.c.l.b16 %v553
        %v593 = vpack.c.b16 %v578, %v577
        %v594 = vpack.c.b16 %v580, %v579
        %v595 = vpack.c.b16 %v582, %v581
        %v596 = vpack.c.b16 %v584, %v583
        %v597 = vpack.c.b16 %v586, %v585
        %v598 = vpack.c.b16 %v588, %v587
        %v599 = vpack.c.b16 %v590, %v589
        %v600 = vpack.c.b16 %v592, %v591
        %609 = vmatprep.subr.bf16.mxu0 0
        %610 = vmatpush1.bf16.msra.mxu0 %v600
        %611 = vmatprep.subr.bf16.mxu0 0
        %612 = vmatpush1.bf16.msra.mxu0 %v599
        %613 = vmatprep.subr.bf16.mxu0 0
        %614 = vmatpush1.bf16.msra.mxu0 %v598
        %615 = vmatprep.subr.bf16.mxu0 0
        %616 = vmatpush1.bf16.msra.mxu0 %v597
        %617 = vmatprep.subr.bf16.mxu0 0
        %618 = vmatpush1.bf16.msra.mxu0 %v596
        %619 = vmatprep.subr.bf16.mxu0 0
        %620 = vmatpush1.bf16.msra.mxu0 %v595
        %621 = vmatprep.subr.bf16.mxu0 0
        %622 = vmatpush1.bf16.msra.mxu0 %v594
        %623 = vmatprep.subr.bf16.mxu0 0
        %624 = vmatpush1.bf16.msra.mxu0 %v593
        %625 = vmatprep.subr.bf16.mxu0 0
        %626 = vmatpush2.bf16.msra.mxu0 0
        %627 = vmatprep.subr.bf16.mxu0 0
        %628 = vmatpush2.bf16.msra.mxu0 0
        %629 = vmatprep.subr.bf16.mxu0 0
        %630 = vmatpush2.bf16.msra.mxu0 0
        %631 = vmatprep.subr.bf16.mxu0 0
        %632 = vmatpush2.bf16.msra.mxu0 0
        %633 = vmatprep.subr.bf16.mxu0 0
        %634 = vmatpush2.bf16.msra.mxu0 0
        %635 = vmatprep.subr.bf16.mxu0 0
        %636 = vmatpush2.bf16.msra.mxu0 0
        %637 = vmatprep.subr.bf16.mxu0 0
        %638 = vmatpush2.bf16.msra.mxu0 0
        %639 = vmatprep.subr.bf16.mxu0 0
        %640 = vmatpush2.bf16.msra.mxu0 0
        %641 = vmatprep.mubr.bf16.mxu0 0
        %642 = vmatmul.mubr.bf16.gmra.mxu0 %v533
        %v643 = vpop.f32.mrf.mxu0
        %v644 = vadd.f32 %v559, %v643
        %v645 = vpop.f32.mrf.mxu0
        %v646 = vpop.f32.mrf.mxu0
        %v647 = vpop.f32.mrf.mxu0
        %648 = vdwg.mxu0
        %v649 = vld [vmem:[#allocation10] sm:$0xf]
        %v650 = vld [vmem:[#allocation10 + $0x4] sm:$0xf]
        %v651 = vld [vmem:[#allocation10 + $0x8] sm:$0xf]
        %v652 = vld [vmem:[#allocation10 + $0xc] sm:$0xf]
        %v653 = vld [vmem:[#allocation10 + $0x10] sm:$0xf]
        %v654 = vld [vmem:[#allocation10 + $0x14] sm:$0xf]
        %v655 = vld [vmem:[#allocation10 + $0x18] sm:$0xf]
        %v656 = vld [vmem:[#allocation10 + $0x1c] sm:$0xf]
        %v657 = vld [vmem:[#allocation10 + $0x20] sm:$0xf]
        %v658 = vld [vmem:[#allocation10 + $0x24] sm:$0xf]
        %v659 = vld [vmem:[#allocation10 + $0x28] sm:$0xf]
        %v660 = vld [vmem:[#allocation10 + $0x2c] sm:$0xf]
        %v661 = vld [vmem:[#allocation10 + $0x30] sm:$0xf]
        %v662 = vld [vmem:[#allocation10 + $0x34] sm:$0xf]
        %v663 = vld [vmem:[#allocation10 + $0x38] sm:$0xf]
        %v664 = vld [vmem:[#allocation10 + $0x3c] sm:$0xf]
        %v665 = vld [vmem:[%s6] sm:$0x1]
        %v667 = vlaneseq
        %v668 = vshrl.u32 %v667, 7
        %v669 = vsub.s32 0, %v668
        %v670 = vrot.slane %v665, %v669
        %v688 = vunpack.c.l.b16 %v649
        %v689 = vunpack.c.l.b16 %v650
        %v690 = vunpack.c.l.b16 %v651
        %v691 = vunpack.c.l.b16 %v652
        %v692 = vunpack.c.l.b16 %v653
        %v693 = vunpack.c.l.b16 %v654
        %v694 = vunpack.c.l.b16 %v655
        %v695 = vunpack.c.l.b16 %v656
        %v696 = vunpack.c.l.b16 %v657
        %v697 = vunpack.c.l.b16 %v658
        %v698 = vunpack.c.l.b16 %v659
        %v699 = vunpack.c.l.b16 %v660
        %v700 = vunpack.c.l.b16 %v661
        %v701 = vunpack.c.l.b16 %v662
        %v702 = vunpack.c.l.b16 %v663
        %v703 = vunpack.c.l.b16 %v664
        %v704 = vpack.c.b16 %v689, %v688
        %v705 = vpack.c.b16 %v691, %v690
        %v706 = vpack.c.b16 %v693, %v692
        %v707 = vpack.c.b16 %v695, %v694
        %v708 = vpack.c.b16 %v697, %v696
        %v709 = vpack.c.b16 %v699, %v698
        %v710 = vpack.c.b16 %v701, %v700
        %v711 = vpack.c.b16 %v703, %v702
        %720 = vmatprep.subr.bf16.mxu0 0
        %721 = vmatpush1.bf16.msra.mxu0 %v711
        %722 = vmatprep.subr.bf16.mxu0 0
        %723 = vmatpush1.bf16.msra.mxu0 %v710
        %724 = vmatprep.subr.bf16.mxu0 0
        %725 = vmatpush1.bf16.msra.mxu0 %v709
        %726 = vmatprep.subr.bf16.mxu0 0
        %727 = vmatpush1.bf16.msra.mxu0 %v708
        %728 = vmatprep.subr.bf16.mxu0 0
        %729 = vmatpush1.bf16.msra.mxu0 %v707
        %730 = vmatprep.subr.bf16.mxu0 0
        %731 = vmatpush1.bf16.msra.mxu0 %v706
        %732 = vmatprep.subr.bf16.mxu0 0
        %733 = vmatpush1.bf16.msra.mxu0 %v705
        %734 = vmatprep.subr.bf16.mxu0 0
        %735 = vmatpush1.bf16.msra.mxu0 %v704
        %736 = vmatprep.subr.bf16.mxu0 0
        %737 = vmatpush2.bf16.msra.mxu0 0
        %738 = vmatprep.subr.bf16.mxu0 0
        %739 = vmatpush2.bf16.msra.mxu0 0
        %740 = vmatprep.subr.bf16.mxu0 0
        %741 = vmatpush2.bf16.msra.mxu0 0
        %742 = vmatprep.subr.bf16.mxu0 0
        %743 = vmatpush2.bf16.msra.mxu0 0
        %744 = vmatprep.subr.bf16.mxu0 0
        %745 = vmatpush2.bf16.msra.mxu0 0
        %746 = vmatprep.subr.bf16.mxu0 0
        %747 = vmatpush2.bf16.msra.mxu0 0
        %748 = vmatprep.subr.bf16.mxu0 0
        %749 = vmatpush2.bf16.msra.mxu0 0
        %750 = vmatprep.subr.bf16.mxu0 0
        %751 = vmatpush2.bf16.msra.mxu0 0
        %752 = vmatprep.mubr.bf16.mxu0 0
        %753 = vmatmul.mubr.bf16.gmra.mxu0 %v535
        %v754 = vpop.f32.mrf.mxu0
        %v755 = vadd.f32 %v670, %v754
        %v756 = vpop.f32.mrf.mxu0
        %v757 = vpop.f32.mrf.mxu0
        %v758 = vpop.f32.mrf.mxu0
        %759 = vdwg.mxu0
        %v760 = vld [vmem:[#allocation11] sm:$0xf]
        %v761 = vld [vmem:[#allocation11 + $0x4] sm:$0xf]
        %v762 = vld [vmem:[#allocation11 + $0x8] sm:$0xf]
        %v763 = vld [vmem:[#allocation11 + $0xc] sm:$0xf]
        %v764 = vld [vmem:[#allocation11 + $0x10] sm:$0xf]
        %v765 = vld [vmem:[#allocation11 + $0x14] sm:$0xf]
        %v766 = vld [vmem:[#allocation11 + $0x18] sm:$0xf]
        %v767 = vld [vmem:[#allocation11 + $0x1c] sm:$0xf]
        %v768 = vld [vmem:[#allocation11 + $0x20] sm:$0xf]
        %v769 = vld [vmem:[#allocation11 + $0x24] sm:$0xf]
        %v770 = vld [vmem:[#allocation11 + $0x28] sm:$0xf]
        %v771 = vld [vmem:[#allocation11 + $0x2c] sm:$0xf]
        %v772 = vld [vmem:[#allocation11 + $0x30] sm:$0xf]
        %v773 = vld [vmem:[#allocation11 + $0x34] sm:$0xf]
        %v774 = vld [vmem:[#allocation11 + $0x38] sm:$0xf]
        %v775 = vld [vmem:[#allocation11 + $0x3c] sm:$0xf]
        %v776 = vld [vmem:[%s8] sm:$0x1]
        %v778 = vlaneseq
        %v779 = vshrl.u32 %v778, 7
        %v780 = vsub.s32 0, %v779
        %v781 = vrot.slane %v776, %v780
        %v799 = vunpack.c.l.b16 %v760
        %v800 = vunpack.c.l.b16 %v761
        %v801 = vunpack.c.l.b16 %v762
        %v802 = vunpack.c.l.b16 %v763
        %v803 = vunpack.c.l.b16 %v764
        %v804 = vunpack.c.l.b16 %v765
        %v805 = vunpack.c.l.b16 %v766
        %v806 = vunpack.c.l.b16 %v767
        %v807 = vunpack.c.l.b16 %v768
        %v808 = vunpack.c.l.b16 %v769
        %v809 = vunpack.c.l.b16 %v770
        %v810 = vunpack.c.l.b16 %v771
        %v811 = vunpack.c.l.b16 %v772
        %v812 = vunpack.c.l.b16 %v773
        %v813 = vunpack.c.l.b16 %v774
        %v814 = vunpack.c.l.b16 %v775
        %v815 = vpack.c.b16 %v800, %v799
        %v816 = vpack.c.b16 %v802, %v801
        %v817 = vpack.c.b16 %v804, %v803
        %v818 = vpack.c.b16 %v806, %v805
        %v819 = vpack.c.b16 %v808, %v807
        %v820 = vpack.c.b16 %v810, %v809
        %v821 = vpack.c.b16 %v812, %v811
        %v822 = vpack.c.b16 %v814, %v813
        %831 = vmatprep.subr.bf16.mxu0 0
        %832 = vmatpush1.bf16.msra.mxu0 %v822
        %833 = vmatprep.subr.bf16.mxu0 0
        %834 = vmatpush1.bf16.msra.mxu0 %v821
        %835 = vmatprep.subr.bf16.mxu0 0
        %836 = vmatpush1.bf16.msra.mxu0 %v820
        %837 = vmatprep.subr.bf16.mxu0 0
        %838 = vmatpush1.bf16.msra.mxu0 %v819
        %839 = vmatprep.subr.bf16.mxu0 0
        %840 = vmatpush1.bf16.msra.mxu0 %v818
        %841 = vmatprep.subr.bf16.mxu0 0
        %842 = vmatpush1.bf16.msra.mxu0 %v817
        %843 = vmatprep.subr.bf16.mxu0 0
        %844 = vmatpush1.bf16.msra.mxu0 %v816
        %845 = vmatprep.subr.bf16.mxu0 0
        %846 = vmatpush1.bf16.msra.mxu0 %v815
        %847 = vmatprep.subr.bf16.mxu0 0
        %848 = vmatpush2.bf16.msra.mxu0 0
        %849 = vmatprep.subr.bf16.mxu0 0
        %850 = vmatpush2.bf16.msra.mxu0 0
        %851 = vmatprep.subr.bf16.mxu0 0
        %852 = vmatpush2.bf16.msra.mxu0 0
        %853 = vmatprep.subr.bf16.mxu0 0
        %854 = vmatpush2.bf16.msra.mxu0 0
        %855 = vmatprep.subr.bf16.mxu0 0
        %856 = vmatpush2.bf16.msra.mxu0 0
        %857 = vmatprep.subr.bf16.mxu0 0
        %858 = vmatpush2.bf16.msra.mxu0 0
        %859 = vmatprep.subr.bf16.mxu0 0
        %860 = vmatpush2.bf16.msra.mxu0 0
        %861 = vmatprep.subr.bf16.mxu0 0
        %862 = vmatpush2.bf16.msra.mxu0 0
        %863 = vmatprep.mubr.bf16.mxu0 0
        %864 = vmatmul.mubr.bf16.gmra.mxu0 %v537
        %v865 = vpop.f32.mrf.mxu0
        %v866 = vadd.f32 %v781, %v865
        %v867 = vpop.f32.mrf.mxu0
        %v868 = vpop.f32.mrf.mxu0
        %v869 = vpop.f32.mrf.mxu0
        %870 = vdwg.mxu0
        %v871 = vpack.c.bf16 %v644, %v644
        %v872 = vpack.c.bf16 %v755, %v755
        %v873 = vpack.c.bf16 %v866, %v866
        %vm874 = vcmask 261120
        %v876 = vsel %vm874, %v871, 0
        %v879 = vsel %vm874, %v872, 0
        %881 = vmatprep.subr.bf16.mxu0 0
        %882 = vmatpush1.bf16.xpose.msra.mxu0 0
        %883 = vmatprep.subr.bf16.mxu0 0
        %884 = vmatpush1.bf16.xpose.msra.mxu0 0
        %885 = vmatprep.subr.bf16.mxu0 0
        %886 = vmatpush1.bf16.xpose.msra.mxu0 0
        %887 = vmatprep.subr.bf16.mxu0 0
        %888 = vmatpush1.bf16.xpose.msra.mxu0 0
        %889 = vmatprep.subr.bf16.mxu0 0
        %890 = vmatpush1.bf16.xpose.msra.mxu0 0
        %891 = vmatprep.subr.bf16.mxu0 0
        %892 = vmatpush1.bf16.xpose.msra.mxu0 0
        %893 = vmatprep.subr.bf16.mxu0 0
        %894 = vmatpush1.bf16.xpose.msra.mxu0 0
        %895 = vmatprep.subr.bf16.mxu0 0
        %896 = vmatpush1.bf16.xpose.msra.mxu0 %v879
        %897 = vmatprep.subr.bf16.mxu0 0
        %898 = vmatpush2.bf16.xpose.msra.mxu0 0
        %899 = vmatprep.subr.bf16.mxu0 0
        %900 = vmatpush2.bf16.xpose.msra.mxu0 0
        %901 = vmatprep.subr.bf16.mxu0 0
        %902 = vmatpush2.bf16.xpose.msra.mxu0 0
        %903 = vmatprep.subr.bf16.mxu0 0
        %904 = vmatpush2.bf16.xpose.msra.mxu0 0
        %905 = vmatprep.subr.bf16.mxu0 0
        %906 = vmatpush2.bf16.xpose.msra.mxu0 0
        %907 = vmatprep.subr.bf16.mxu0 0
        %908 = vmatpush2.bf16.xpose.msra.mxu0 0
        %909 = vmatprep.subr.bf16.mxu0 0
        %910 = vmatpush2.bf16.xpose.msra.mxu0 0
        %911 = vmatprep.subr.bf16.mxu0 0
        %912 = vmatpush2.bf16.xpose.msra.mxu0 0
        %913 = vmatprep.mubr.bf16.mxu0 0
        %914 = vmatmul.mubr.bf16.gmra.mxu0 %v876
        %v915 = vpop.f32.mrf.mxu0
        %v916 = vadd.f32 0.0, %v915
        %v917 = vpop.f32.mrf.mxu0
        %v918 = vpop.f32.mrf.mxu0
        %v919 = vpop.f32.mrf.mxu0
        %920 = vdwg.mxu0
        %vm921 = vcmask 64512
        %v922 = vsel %vm921, %v916, -inf
        %923 = vmax.xlane.f32.xlu0 %v922
        %v924 = vpop.xlane.xlu0 %923
        %v925 = vsub.f32 %v916, %v924
        %v926 = vmul.f32 %v925, 1.442695
        %v927 = vpow.pop %v926
        %v928 = vsel %vm921, %v927, 0.0
        %929 = vadd.xlane.f32.xlu0 %v928
        %v930 = vpop.xlane.xlu0 %929
        %v931 = vrcp.pop %v930
        %v932 = vmul.f32 %v927, %v931
        %v933 = vpack.c.bf16 %v932, %v932
        %v935 = vsel %vm921, %v933, 0
        %vm937 = vcmask 1043456
        %v939 = vsel %vm937, %v873, 0
        %941 = vmatprep.subr.bf16.mxu0 0
        %942 = vmatpush1.bf16.msra.mxu0 0
        %943 = vmatprep.subr.bf16.mxu0 0
        %944 = vmatpush1.bf16.msra.mxu0 0
        %945 = vmatprep.subr.bf16.mxu0 0
        %946 = vmatpush1.bf16.msra.mxu0 0
        %947 = vmatprep.subr.bf16.mxu0 0
        %948 = vmatpush1.bf16.msra.mxu0 0
        %949 = vmatprep.subr.bf16.mxu0 0
        %950 = vmatpush1.bf16.msra.mxu0 0
        %951 = vmatprep.subr.bf16.mxu0 0
        %952 = vmatpush1.bf16.msra.mxu0 0
        %953 = vmatprep.subr.bf16.mxu0 0
        %954 = vmatpush1.bf16.msra.mxu0 0
        %955 = vmatprep.subr.bf16.mxu0 0
        %956 = vmatpush1.bf16.msra.mxu0 %v939
        %957 = vmatprep.subr.bf16.mxu0 0
        %958 = vmatpush2.bf16.msra.mxu0 0
        %959 = vmatprep.subr.bf16.mxu0 0
        %960 = vmatpush2.bf16.msra.mxu0 0
        %961 = vmatprep.subr.bf16.mxu0 0
        %962 = vmatpush2.bf16.msra.mxu0 0
        %963 = vmatprep.subr.bf16.mxu0 0
        %964 = vmatpush2.bf16.msra.mxu0 0
        %965 = vmatprep.subr.bf16.mxu0 0
        %966 = vmatpush2.bf16.msra.mxu0 0
        %967 = vmatprep.subr.bf16.mxu0 0
        %968 = vmatpush2.bf16.msra.mxu0 0
        %969 = vmatprep.subr.bf16.mxu0 0
        %970 = vmatpush2.bf16.msra.mxu0 0
        %971 = vmatprep.subr.bf16.mxu0 0
        %972 = vmatpush2.bf16.msra.mxu0 0
        %973 = vmatprep.mubr.bf16.mxu0 0
        %974 = vmatmul.mubr.bf16.gmra.mxu0 %v935
        %v975 = vpop.f32.mrf.mxu0
        %v976 = vadd.f32 0.0, %v975
        %v977 = vpop.f32.mrf.mxu0
        %v978 = vpop.f32.mrf.mxu0
        %v979 = vpop.f32.mrf.mxu0
        %980 = vdwg.mxu0
        %v981 = vpack.c.bf16 %v976, %v976
        %v982 = vld [vmem:[#allocation13] sm:$0xf]
        %v983 = vld [vmem:[#allocation13 + $0x4] sm:$0xf]
        %v984 = vld [vmem:[#allocation13 + $0x8] sm:$0xf]
        %v985 = vld [vmem:[#allocation13 + $0xc] sm:$0xf]
        %987 = vrot.lane.b32.xlu0 %v871, 96
        %v988 = vpop.permute.xlu0 %987
        %990 = vrot.lane.b32.xlu0 %v872, 96
        %v991 = vpop.permute.xlu0 %990
        %v993 = vsel %vm874, %v988, 0
        %v996 = vsel %vm874, %v991, 0
        %998 = vmatprep.subr.bf16.mxu0 0
        %999 = vmatpush1.bf16.xpose.msra.mxu0 0
        %1000 = vmatprep.subr.bf16.mxu0 0
        %1001 = vmatpush1.bf16.xpose.msra.mxu0 0
        %1002 = vmatprep.subr.bf16.mxu0 0
        %1003 = vmatpush1.bf16.xpose.msra.mxu0 0
        %1004 = vmatprep.subr.bf16.mxu0 0
        %1005 = vmatpush1.bf16.xpose.msra.mxu0 0
        %1006 = vmatprep.subr.bf16.mxu0 0
        %1007 = vmatpush1.bf16.xpose.msra.mxu0 0
        %1008 = vmatprep.subr.bf16.mxu0 0
        %1009 = vmatpush1.bf16.xpose.msra.mxu0 0
        %1010 = vmatprep.subr.bf16.mxu0 0
        %1011 = vmatpush1.bf16.xpose.msra.mxu0 0
        %1012 = vmatprep.subr.bf16.mxu0 0
        %1013 = vmatpush1.bf16.xpose.msra.mxu0 %v996
        %1014 = vmatprep.subr.bf16.mxu0 0
        %1015 = vmatpush2.bf16.xpose.msra.mxu0 0
        %1016 = vmatprep.subr.bf16.mxu0 0
        %1017 = vmatpush2.bf16.xpose.msra.mxu0 0
        %1018 = vmatprep.subr.bf16.mxu0 0
        %1019 = vmatpush2.bf16.xpose.msra.mxu0 0
        %1020 = vmatprep.subr.bf16.mxu0 0
        %1021 = vmatpush2.bf16.xpose.msra.mxu0 0
        %1022 = vmatprep.subr.bf16.mxu0 0
        %1023 = vmatpush2.bf16.xpose.msra.mxu0 0
        %1024 = vmatprep.subr.bf16.mxu0 0
        %1025 = vmatpush2.bf16.xpose.msra.mxu0 0
        %1026 = vmatprep.subr.bf16.mxu0 0
        %1027 = vmatpush2.bf16.xpose.msra.mxu0 0
        %1028 = vmatprep.subr.bf16.mxu0 0
        %1029 = vmatpush2.bf16.xpose.msra.mxu0 0
        %1030 = vmatprep.mubr.bf16.mxu0 0
        %1031 = vmatmul.mubr.bf16.gmra.mxu0 %v993
        %v1032 = vpop.f32.mrf.mxu0
        %v1033 = vadd.f32 0.0, %v1032
        %v1034 = vpop.f32.mrf.mxu0
        %v1035 = vpop.f32.mrf.mxu0
        %v1036 = vpop.f32.mrf.mxu0
        %1037 = vdwg.mxu0
        %v1038 = vsel %vm921, %v1033, -inf
        %1039 = vmax.xlane.f32.xlu0 %v1038
        %v1040 = vpop.xlane.xlu0 %1039
        %v1041 = vsub.f32 %v1033, %v1040
        %v1042 = vmul.f32 %v1041, 1.442695
        %v1043 = vpow.pop %v1042
        %v1044 = vsel %vm921, %v1043, 0.0
        %1045 = vadd.xlane.f32.xlu0 %v1044
        %v1046 = vpop.xlane.xlu0 %1045
        %v1047 = vrcp.pop %v1046
        %v1048 = vmul.f32 %v1043, %v1047
        %v1049 = vpack.c.bf16 %v1048, %v1048
        %1051 = vrot.lane.b32.xlu0 %v873, 96
        %v1052 = vpop.permute.xlu0 %1051
        %v1054 = vsel %vm921, %v1049, 0
        %v1057 = vsel %vm937, %v1052, 0
        %1059 = vmatprep.subr.bf16.mxu0 0
        %1060 = vmatpush1.bf16.msra.mxu0 0
        %1061 = vmatprep.subr.bf16.mxu0 0
        %1062 = vmatpush1.bf16.msra.mxu0 0
        %1063 = vmatprep.subr.bf16.mxu0 0
        %1064 = vmatpush1.bf16.msra.mxu0 0
        %1065 = vmatprep.subr.bf16.mxu0 0
        %1066 = vmatpush1.bf16.msra.mxu0 0
        %1067 = vmatprep.subr.bf16.mxu0 0
        %1068 = vmatpush1.bf16.msra.mxu0 0
        %1069 = vmatprep.subr.bf16.mxu0 0
        %1070 = vmatpush1.bf16.msra.mxu0 0
        %1071 = vmatprep.subr.bf16.mxu0 0
        %1072 = vmatpush1.bf16.msra.mxu0 0
        %1073 = vmatprep.subr.bf16.mxu0 0
        %1074 = vmatpush1.bf16.msra.mxu0 %v1057
        %1075 = vmatprep.subr.bf16.mxu0 0
        %1076 = vmatpush2.bf16.msra.mxu0 0
        %1077 = vmatprep.subr.bf16.mxu0 0
        %1078 = vmatpush2.bf16.msra.mxu0 0
        %1079 = vmatprep.subr.bf16.mxu0 0
        %1080 = vmatpush2.bf16.msra.mxu0 0
        %1081 = vmatprep.subr.bf16.mxu0 0
        %1082 = vmatpush2.bf16.msra.mxu0 0
        %1083 = vmatprep.subr.bf16.mxu0 0
        %1084 = vmatpush2.bf16.msra.mxu0 0
        %1085 = vmatprep.subr.bf16.mxu0 0
        %1086 = vmatpush2.bf16.msra.mxu0 0
        %1087 = vmatprep.subr.bf16.mxu0 0
        %1088 = vmatpush2.bf16.msra.mxu0 0
        %1089 = vmatprep.subr.bf16.mxu0 0
        %1090 = vmatpush2.bf16.msra.mxu0 0
        %1091 = vmatprep.mubr.bf16.mxu0 0
        %1092 = vmatmul.mubr.bf16.gmra.mxu0 %v1054
        %v1093 = vpop.f32.mrf.mxu0
        %v1094 = vadd.f32 0.0, %v1093
        %v1095 = vpop.f32.mrf.mxu0
        %v1096 = vpop.f32.mrf.mxu0
        %v1097 = vpop.f32.mrf.mxu0
        %1098 = vdwg.mxu0
        %v1099 = vpack.c.bf16 %v1094, %v1094
        %v1100 = vld [vmem:[#allocation13 + $0x10] sm:$0xf]
        %v1101 = vld [vmem:[#allocation13 + $0x14] sm:$0xf]
        %v1102 = vld [vmem:[#allocation13 + $0x18] sm:$0xf]
        %v1103 = vld [vmem:[#allocation13 + $0x1c] sm:$0xf]
        %v1108 = vunpack.c.l.b16 %v1100
        %v1109 = vunpack.c.l.b16 %v1101
        %v1110 = vunpack.c.l.b16 %v1102
        %v1111 = vunpack.c.l.b16 %v1103
        %v1112 = vpack.c.b16 %v1109, %v1108
        %v1113 = vpack.c.b16 %v1111, %v1110
        %v1117 = vsel %vm874, %v1099, 0
        %1119 = vmatprep.subr.bf16.mxu0 0
        %1120 = vmatpush1.bf16.msra.mxu0 0
        %1121 = vmatprep.subr.bf16.mxu0 0
        %1122 = vmatpush1.bf16.msra.mxu0 0
        %1123 = vmatprep.subr.bf16.mxu0 0
        %1124 = vmatpush1.bf16.msra.mxu0 0
        %1125 = vmatprep.subr.bf16.mxu0 0
        %1126 = vmatpush1.bf16.msra.mxu0 0
        %1127 = vmatprep.subr.bf16.mxu0 0
        %1128 = vmatpush1.bf16.msra.mxu0 0
        %1129 = vmatprep.subr.bf16.mxu0 0
        %1130 = vmatpush1.bf16.msra.mxu0 0
        %1131 = vmatprep.subr.bf16.mxu0 0
        %1132 = vmatpush1.bf16.msra.mxu0 %v1113
        %1133 = vmatprep.subr.bf16.mxu0 0
        %1134 = vmatpush1.bf16.msra.mxu0 %v1112
        %1135 = vmatprep.subr.bf16.mxu0 0
        %1136 = vmatpush2.bf16.msra.mxu0 0
        %1137 = vmatprep.subr.bf16.mxu0 0
        %1138 = vmatpush2.bf16.msra.mxu0 0
        %1139 = vmatprep.subr.bf16.mxu0 0
        %1140 = vmatpush2.bf16.msra.mxu0 0
        %1141 = vmatprep.subr.bf16.mxu0 0
        %1142 = vmatpush2.bf16.msra.mxu0 0
        %1143 = vmatprep.subr.bf16.mxu0 0
        %1144 = vmatpush2.bf16.msra.mxu0 0
        %1145 = vmatprep.subr.bf16.mxu0 0
        %1146 = vmatpush2.bf16.msra.mxu0 0
        %1147 = vmatprep.subr.bf16.mxu0 0
        %1148 = vmatpush2.bf16.msra.mxu0 0
        %1149 = vmatprep.subr.bf16.mxu0 0
        %1150 = vmatpush2.bf16.msra.mxu0 0
        %1151 = vmatprep.mubr.bf16.mxu0 0
        %1152 = vmatmul.mubr.bf16.gmra.mxu0 %v1117
        %v1153 = vpop.f32.mrf.mxu0
        %v1154 = vadd.f32 0.0, %v1153
        %v1155 = vpop.f32.mrf.mxu0
        %v1156 = vpop.f32.mrf.mxu0
        %v1157 = vpop.f32.mrf.mxu0
        %1158 = vdwg.mxu0
        %v1163 = vunpack.c.l.b16 %v982
        %v1164 = vunpack.c.l.b16 %v983
        %v1165 = vunpack.c.l.b16 %v984
        %v1166 = vunpack.c.l.b16 %v985
        %v1167 = vpack.c.b16 %v1164, %v1163
        %v1168 = vpack.c.b16 %v1166, %v1165
        %v1172 = vsel %vm874, %v981, 0
        %1174 = vmatprep.subr.bf16.mxu0 0
        %1175 = vmatpush1.bf16.msra.mxu0 0
        %1176 = vmatprep.subr.bf16.mxu0 0
        %1177 = vmatpush1.bf16.msra.mxu0 0
        %1178 = vmatprep.subr.bf16.mxu0 0
        %1179 = vmatpush1.bf16.msra.mxu0 0
        %1180 = vmatprep.subr.bf16.mxu0 0
        %1181 = vmatpush1.bf16.msra.mxu0 0
        %1182 = vmatprep.subr.bf16.mxu0 0
        %1183 = vmatpush1.bf16.msra.mxu0 0
        %1184 = vmatprep.subr.bf16.mxu0 0
        %1185 = vmatpush1.bf16.msra.mxu0 0
        %1186 = vmatprep.subr.bf16.mxu0 0
        %1187 = vmatpush1.bf16.msra.mxu0 %v1168
        %1188 = vmatprep.subr.bf16.mxu0 0
        %1189 = vmatpush1.bf16.msra.mxu0 %v1167
        %1190 = vmatprep.subr.bf16.mxu0 0
        %1191 = vmatpush2.bf16.msra.mxu0 0
        %1192 = vmatprep.subr.bf16.mxu0 0
        %1193 = vmatpush2.bf16.msra.mxu0 0
        %1194 = vmatprep.subr.bf16.mxu0 0
        %1195 = vmatpush2.bf16.msra.mxu0 0
        %1196 = vmatprep.subr.bf16.mxu0 0
        %1197 = vmatpush2.bf16.msra.mxu0 0
        %1198 = vmatprep.subr.bf16.mxu0 0
        %1199 = vmatpush2.bf16.msra.mxu0 0
        %1200 = vmatprep.subr.bf16.mxu0 0
        %1201 = vmatpush2.bf16.msra.mxu0 0
        %1202 = vmatprep.subr.bf16.mxu0 0
        %1203 = vmatpush2.bf16.msra.mxu0 0
        %1204 = vmatprep.subr.bf16.mxu0 0
        %1205 = vmatpush2.bf16.msra.mxu0 0
        %1206 = vmatprep.mubr.bf16.mxu0 0
        %1207 = vmatmul.mubr.bf16.gmra.mxu0 %v1172
        %v1208 = vpop.f32.mrf.mxu0
        %v1209 = vadd.f32 %v1154, %v1208
        %v1210 = vpop.f32.mrf.mxu0
        %v1211 = vpop.f32.mrf.mxu0
        %v1212 = vpop.f32.mrf.mxu0
        %1213 = vdwg.mxu0
        %1214 = vrot.lane.b32.xlu0 %v871, 64
        %v1215 = vpop.permute.xlu0 %1214
        %1216 = vrot.lane.b32.xlu0 %v872, 64
        %v1217 = vpop.permute.xlu0 %1216
        %v1219 = vsel %vm874, %v1215, 0
        %v1222 = vsel %vm874, %v1217, 0
        %1224 = vmatprep.subr.bf16.mxu0 0
        %1225 = vmatpush1.bf16.xpose.msra.mxu0 0
        %1226 = vmatprep.subr.bf16.mxu0 0
        %1227 = vmatpush1.bf16.xpose.msra.mxu0 0
        %1228 = vmatprep.subr.bf16.mxu0 0
        %1229 = vmatpush1.bf16.xpose.msra.mxu0 0
        %1230 = vmatprep.subr.bf16.mxu0 0
        %1231 = vmatpush1.bf16.xpose.msra.mxu0 0
        %1232 = vmatprep.subr.bf16.mxu0 0
        %1233 = vmatpush1.bf16.xpose.msra.mxu0 0
        %1234 = vmatprep.subr.bf16.mxu0 0
        %1235 = vmatpush1.bf16.xpose.msra.mxu0 0
        %1236 = vmatprep.subr.bf16.mxu0 0
        %1237 = vmatpush1.bf16.xpose.msra.mxu0 0
        %1238 = vmatprep.subr.bf16.mxu0 0
        %1239 = vmatpush1.bf16.xpose.msra.mxu0 %v1222
        %1240 = vmatprep.subr.bf16.mxu0 0
        %1241 = vmatpush2.bf16.xpose.msra.mxu0 0
        %1242 = vmatprep.subr.bf16.mxu0 0
        %1243 = vmatpush2.bf16.xpose.msra.mxu0 0
        %1244 = vmatprep.subr.bf16.mxu0 0
        %1245 = vmatpush2.bf16.xpose.msra.mxu0 0
        %1246 = vmatprep.subr.bf16.mxu0 0
        %1247 = vmatpush2.bf16.xpose.msra.mxu0 0
        %1248 = vmatprep.subr.bf16.mxu0 0
        %1249 = vmatpush2.bf16.xpose.msra.mxu0 0
        %1250 = vmatprep.subr.bf16.mxu0 0
        %1251 = vmatpush2.bf16.xpose.msra.mxu0 0
        %1252 = vmatprep.subr.bf16.mxu0 0
        %1253 = vmatpush2.bf16.xpose.msra.mxu0 0
        %1254 = vmatprep.subr.bf16.mxu0 0
        %1255 = vmatpush2.bf16.xpose.msra.mxu0 0
        %1256 = vmatprep.mubr.bf16.mxu0 0
        %1257 = vmatmul.mubr.bf16.gmra.mxu0 %v1219
        %v1258 = vpop.f32.mrf.mxu0
        %v1259 = vadd.f32 0.0, %v1258
        %v1260 = vpop.f32.mrf.mxu0
        %v1261 = vpop.f32.mrf.mxu0
        %v1262 = vpop.f32.mrf.mxu0
        %1263 = vdwg.mxu0
        %v1264 = vsel %vm921, %v1259, -inf
        %1265 = vmax.xlane.f32.xlu0 %v1264
        %v1266 = vpop.xlane.xlu0 %1265
        %v1267 = vsub.f32 %v1259, %v1266
        %v1268 = vmul.f32 %v1267, 1.442695
        %v1269 = vpow.pop %v1268
        %v1270 = vsel %vm921, %v1269, 0.0
        %1271 = vadd.xlane.f32.xlu0 %v1270
        %v1272 = vpop.xlane.xlu0 %1271
        %v1273 = vrcp.pop %v1272
        %v1274 = vmul.f32 %v1269, %v1273
        %v1275 = vpack.c.bf16 %v1274, %v1274
        %1276 = vrot.lane.b32.xlu0 %v873, 64
        %v1277 = vpop.permute.xlu0 %1276
        %v1279 = vsel %vm921, %v1275, 0
        %v1282 = vsel %vm937, %v1277, 0
        %1284 = vmatprep.subr.bf16.mxu0 0
        %1285 = vmatpush1.bf16.msra.mxu0 0
        %1286 = vmatprep.subr.bf16.mxu0 0
        %1287 = vmatpush1.bf16.msra.mxu0 0
        %1288 = vmatprep.subr.bf16.mxu0 0
        %1289 = vmatpush1.bf16.msra.mxu0 0
        %1290 = vmatprep.subr.bf16.mxu0 0
        %1291 = vmatpush1.bf16.msra.mxu0 0
        %1292 = vmatprep.subr.bf16.mxu0 0
        %1293 = vmatpush1.bf16.msra.mxu0 0
        %1294 = vmatprep.subr.bf16.mxu0 0
        %1295 = vmatpush1.bf16.msra.mxu0 0
        %1296 = vmatprep.subr.bf16.mxu0 0
        %1297 = vmatpush1.bf16.msra.mxu0 0
        %1298 = vmatprep.subr.bf16.mxu0 0
        %1299 = vmatpush1.bf16.msra.mxu0 %v1282
        %1300 = vmatprep.subr.bf16.mxu0 0
        %1301 = vmatpush2.bf16.msra.mxu0 0
        %1302 = vmatprep.subr.bf16.mxu0 0
        %1303 = vmatpush2.bf16.msra.mxu0 0
        %1304 = vmatprep.subr.bf16.mxu0 0
        %1305 = vmatpush2.bf16.msra.mxu0 0
        %1306 = vmatprep.subr.bf16.mxu0 0
        %1307 = vmatpush2.bf16.msra.mxu0 0
        %1308 = vmatprep.subr.bf16.mxu0 0
        %1309 = vmatpush2.bf16.msra.mxu0 0
        %1310 = vmatprep.subr.bf16.mxu0 0
        %1311 = vmatpush2.bf16.msra.mxu0 0
        %1312 = vmatprep.subr.bf16.mxu0 0
        %1313 = vmatpush2.bf16.msra.mxu0 0
        %1314 = vmatprep.subr.bf16.mxu0 0
        %1315 = vmatpush2.bf16.msra.mxu0 0
        %1316 = vmatprep.mubr.bf16.mxu0 0
        %1317 = vmatmul.mubr.bf16.gmra.mxu0 %v1279
        %v1318 = vpop.f32.mrf.mxu0
        %v1319 = vadd.f32 0.0, %v1318
        %v1320 = vpop.f32.mrf.mxu0
        %v1321 = vpop.f32.mrf.mxu0
        %v1322 = vpop.f32.mrf.mxu0
        %1323 = vdwg.mxu0
        %v1324 = vpack.c.bf16 %v1319, %v1319
        %v1325 = vld [vmem:[#allocation13 + $0x20] sm:$0xf]
        %v1326 = vld [vmem:[#allocation13 + $0x24] sm:$0xf]
        %v1327 = vld [vmem:[#allocation13 + $0x28] sm:$0xf]
        %v1328 = vld [vmem:[#allocation13 + $0x2c] sm:$0xf]
        %v1333 = vunpack.c.l.b16 %v1325
        %v1334 = vunpack.c.l.b16 %v1326
        %v1335 = vunpack.c.l.b16 %v1327
        %v1336 = vunpack.c.l.b16 %v1328
        %v1337 = vpack.c.b16 %v1334, %v1333
        %v1338 = vpack.c.b16 %v1336, %v1335
        %v1342 = vsel %vm874, %v1324, 0
        %1344 = vmatprep.subr.bf16.mxu0 0
        %1345 = vmatpush1.bf16.msra.mxu0 0
        %1346 = vmatprep.subr.bf16.mxu0 0
        %1347 = vmatpush1.bf16.msra.mxu0 0
        %1348 = vmatprep.subr.bf16.mxu0 0
        %1349 = vmatpush1.bf16.msra.mxu0 0
        %1350 = vmatprep.subr.bf16.mxu0 0
        %1351 = vmatpush1.bf16.msra.mxu0 0
        %1352 = vmatprep.subr.bf16.mxu0 0
        %1353 = vmatpush1.bf16.msra.mxu0 0
        %1354 = vmatprep.subr.bf16.mxu0 0
        %1355 = vmatpush1.bf16.msra.mxu0 0
        %1356 = vmatprep.subr.bf16.mxu0 0
        %1357 = vmatpush1.bf16.msra.mxu0 %v1338
        %1358 = vmatprep.subr.bf16.mxu0 0
        %1359 = vmatpush1.bf16.msra.mxu0 %v1337
        %1360 = vmatprep.subr.bf16.mxu0 0
        %1361 = vmatpush2.bf16.msra.mxu0 0
        %1362 = vmatprep.subr.bf16.mxu0 0
        %1363 = vmatpush2.bf16.msra.mxu0 0
        %1364 = vmatprep.subr.bf16.mxu0 0
        %1365 = vmatpush2.bf16.msra.mxu0 0
        %1366 = vmatprep.subr.bf16.mxu0 0
        %1367 = vmatpush2.bf16.msra.mxu0 0
        %1368 = vmatprep.subr.bf16.mxu0 0
        %1369 = vmatpush2.bf16.msra.mxu0 0
        %1370 = vmatprep.subr.bf16.mxu0 0
        %1371 = vmatpush2.bf16.msra.mxu0 0
        %1372 = vmatprep.subr.bf16.mxu0 0
        %1373 = vmatpush2.bf16.msra.mxu0 0
        %1374 = vmatprep.subr.bf16.mxu0 0
        %1375 = vmatpush2.bf16.msra.mxu0 0
        %1376 = vmatprep.mubr.bf16.mxu0 0
        %1377 = vmatmul.mubr.bf16.gmra.mxu0 %v1342
        %v1378 = vpop.f32.mrf.mxu0
        %v1379 = vadd.f32 0.0, %v1378
        %v1380 = vpop.f32.mrf.mxu0
        %v1381 = vpop.f32.mrf.mxu0
        %v1382 = vpop.f32.mrf.mxu0
        %1383 = vdwg.mxu0
        %v1384 = vadd.f32 %v1209, %v1379
        %1385 = vrot.lane.b32.xlu0 %v871, 32
        %v1386 = vpop.permute.xlu0 %1385
        %1387 = vrot.lane.b32.xlu0 %v872, 32
        %v1388 = vpop.permute.xlu0 %1387
        %v1390 = vsel %vm874, %v1386, 0
        %v1393 = vsel %vm874, %v1388, 0
        %1395 = vmatprep.subr.bf16.mxu0 0
        %1396 = vmatpush1.bf16.xpose.msra.mxu0 0
        %1397 = vmatprep.subr.bf16.mxu0 0
        %1398 = vmatpush1.bf16.xpose.msra.mxu0 0
        %1399 = vmatprep.subr.bf16.mxu0 0
        %1400 = vmatpush1.bf16.xpose.msra.mxu0 0
        %1401 = vmatprep.subr.bf16.mxu0 0
        %1402 = vmatpush1.bf16.xpose.msra.mxu0 0
        %1403 = vmatprep.subr.bf16.mxu0 0
        %1404 = vmatpush1.bf16.xpose.msra.mxu0 0
        %1405 = vmatprep.subr.bf16.mxu0 0
        %1406 = vmatpush1.bf16.xpose.msra.mxu0 0
        %1407 = vmatprep.subr.bf16.mxu0 0
        %1408 = vmatpush1.bf16.xpose.msra.mxu0 0
        %1409 = vmatprep.subr.bf16.mxu0 0
        %1410 = vmatpush1.bf16.xpose.msra.mxu0 %v1393
        %1411 = vmatprep.subr.bf16.mxu0 0
        %1412 = vmatpush2.bf16.xpose.msra.mxu0 0
        %1413 = vmatprep.subr.bf16.mxu0 0
        %1414 = vmatpush2.bf16.xpose.msra.mxu0 0
        %1415 = vmatprep.subr.bf16.mxu0 0
        %1416 = vmatpush2.bf16.xpose.msra.mxu0 0
        %1417 = vmatprep.subr.bf16.mxu0 0
        %1418 = vmatpush2.bf16.xpose.msra.mxu0 0
        %1419 = vmatprep.subr.bf16.mxu0 0
        %1420 = vmatpush2.bf16.xpose.msra.mxu0 0
        %1421 = vmatprep.subr.bf16.mxu0 0
        %1422 = vmatpush2.bf16.xpose.msra.mxu0 0
        %1423 = vmatprep.subr.bf16.mxu0 0
        %1424 = vmatpush2.bf16.xpose.msra.mxu0 0
        %1425 = vmatprep.subr.bf16.mxu0 0
        %1426 = vmatpush2.bf16.xpose.msra.mxu0 0
        %1427 = vmatprep.mubr.bf16.mxu0 0
        %1428 = vmatmul.mubr.bf16.gmra.mxu0 %v1390
        %v1429 = vpop.f32.mrf.mxu0
        %v1430 = vadd.f32 0.0, %v1429
        %v1431 = vpop.f32.mrf.mxu0
        %v1432 = vpop.f32.mrf.mxu0
        %v1433 = vpop.f32.mrf.mxu0
        %1434 = vdwg.mxu0
        %v1435 = vsel %vm921, %v1430, -inf
        %1436 = vmax.xlane.f32.xlu0 %v1435
        %v1437 = vpop.xlane.xlu0 %1436
        %v1438 = vsub.f32 %v1430, %v1437
        %v1439 = vmul.f32 %v1438, 1.442695
        %v1440 = vpow.pop %v1439
        %v1441 = vsel %vm921, %v1440, 0.0
        %1442 = vadd.xlane.f32.xlu0 %v1441
        %v1443 = vpop.xlane.xlu0 %1442
        %v1444 = vrcp.pop %v1443
        %v1445 = vmul.f32 %v1440, %v1444
        %v1446 = vpack.c.bf16 %v1445, %v1445
        %1447 = vrot.lane.b32.xlu0 %v873, 32
        %v1448 = vpop.permute.xlu0 %1447
        %v1450 = vsel %vm921, %v1446, 0
        %v1453 = vsel %vm937, %v1448, 0
        %1455 = vmatprep.subr.bf16.mxu0 0
        %1456 = vmatpush1.bf16.msra.mxu0 0
        %1457 = vmatprep.subr.bf16.mxu0 0
        %1458 = vmatpush1.bf16.msra.mxu0 0
        %1459 = vmatprep.subr.bf16.mxu0 0
        %1460 = vmatpush1.bf16.msra.mxu0 0
        %1461 = vmatprep.subr.bf16.mxu0 0
        %1462 = vmatpush1.bf16.msra.mxu0 0
        %1463 = vmatprep.subr.bf16.mxu0 0
        %1464 = vmatpush1.bf16.msra.mxu0 0
        %1465 = vmatprep.subr.bf16.mxu0 0
        %1466 = vmatpush1.bf16.msra.mxu0 0
        %1467 = vmatprep.subr.bf16.mxu0 0
        %1468 = vmatpush1.bf16.msra.mxu0 0
        %1469 = vmatprep.subr.bf16.mxu0 0
        %1470 = vmatpush1.bf16.msra.mxu0 %v1453
        %1471 = vmatprep.subr.bf16.mxu0 0
        %1472 = vmatpush2.bf16.msra.mxu0 0
        %1473 = vmatprep.subr.bf16.mxu0 0
        %1474 = vmatpush2.bf16.msra.mxu0 0
        %1475 = vmatprep.subr.bf16.mxu0 0
        %1476 = vmatpush2.bf16.msra.mxu0 0
        %1477 = vmatprep.subr.bf16.mxu0 0
        %1478 = vmatpush2.bf16.msra.mxu0 0
        %1479 = vmatprep.subr.bf16.mxu0 0
        %1480 = vmatpush2.bf16.msra.mxu0 0
        %1481 = vmatprep.subr.bf16.mxu0 0
        %1482 = vmatpush2.bf16.msra.mxu0 0
        %1483 = vmatprep.subr.bf16.mxu0 0
        %1484 = vmatpush2.bf16.msra.mxu0 0
        %1485 = vmatprep.subr.bf16.mxu0 0
        %1486 = vmatpush2.bf16.msra.mxu0 0
        %1487 = vmatprep.mubr.bf16.mxu0 0
        %1488 = vmatmul.mubr.bf16.gmra.mxu0 %v1450
        %v1489 = vpop.f32.mrf.mxu0
        %v1490 = vadd.f32 0.0, %v1489
        %v1491 = vpop.f32.mrf.mxu0
        %v1492 = vpop.f32.mrf.mxu0
        %v1493 = vpop.f32.mrf.mxu0
        %1494 = vdwg.mxu0
        %v1495 = vpack.c.bf16 %v1490, %v1490
        %v1496 = vld [vmem:[#allocation13 + $0x30] sm:$0xf]
        %v1497 = vld [vmem:[#allocation13 + $0x34] sm:$0xf]
        %v1498 = vld [vmem:[#allocation13 + $0x38] sm:$0xf]
        %v1499 = vld [vmem:[#allocation13 + $0x3c] sm:$0xf]
        %v1504 = vunpack.c.l.b16 %v1496
        %v1505 = vunpack.c.l.b16 %v1497
        %v1506 = vunpack.c.l.b16 %v1498
        %v1507 = vunpack.c.l.b16 %v1499
        %v1508 = vpack.c.b16 %v1505, %v1504
        %v1509 = vpack.c.b16 %v1507, %v1506
        %v1513 = vsel %vm874, %v1495, 0
        %1515 = vmatprep.subr.bf16.mxu0 0
        %1516 = vmatpush1.bf16.msra.mxu0 0
        %1517 = vmatprep.subr.bf16.mxu0 0
        %1518 = vmatpush1.bf16.msra.mxu0 0
        %1519 = vmatprep.subr.bf16.mxu0 0
        %1520 = vmatpush1.bf16.msra.mxu0 0
        %1521 = vmatprep.subr.bf16.mxu0 0
        %1522 = vmatpush1.bf16.msra.mxu0 0
        %1523 = vmatprep.subr.bf16.mxu0 0
        %1524 = vmatpush1.bf16.msra.mxu0 0
        %1525 = vmatprep.subr.bf16.mxu0 0
        %1526 = vmatpush1.bf16.msra.mxu0 0
        %1527 = vmatprep.subr.bf16.mxu0 0
        %1528 = vmatpush1.bf16.msra.mxu0 %v1509
        %1529 = vmatprep.subr.bf16.mxu0 0
        %1530 = vmatpush1.bf16.msra.mxu0 %v1508
        %1531 = vmatprep.subr.bf16.mxu0 0
        %1532 = vmatpush2.bf16.msra.mxu0 0
        %1533 = vmatprep.subr.bf16.mxu0 0
        %1534 = vmatpush2.bf16.msra.mxu0 0
        %1535 = vmatprep.subr.bf16.mxu0 0
        %1536 = vmatpush2.bf16.msra.mxu0 0
        %1537 = vmatprep.subr.bf16.mxu0 0
        %1538 = vmatpush2.bf16.msra.mxu0 0
        %1539 = vmatprep.subr.bf16.mxu0 0
        %1540 = vmatpush2.bf16.msra.mxu0 0
        %1541 = vmatprep.subr.bf16.mxu0 0
        %1542 = vmatpush2.bf16.msra.mxu0 0
        %1543 = vmatprep.subr.bf16.mxu0 0
        %1544 = vmatpush2.bf16.msra.mxu0 0
        %1545 = vmatprep.subr.bf16.mxu0 0
        %1546 = vmatpush2.bf16.msra.mxu0 0
        %1547 = vmatprep.mubr.bf16.mxu0 0
        %1548 = vmatmul.mubr.bf16.gmra.mxu0 %v1513
        %v1549 = vpop.f32.mrf.mxu0
        %v1550 = vadd.f32 0.0, %v1549
        %v1551 = vpop.f32.mrf.mxu0
        %v1552 = vpop.f32.mrf.mxu0
        %v1553 = vpop.f32.mrf.mxu0
        %1554 = vdwg.mxu0
        %v1555 = vadd.f32 %v1384, %v1550
        %v1556 = vld [vmem:[%s10] sm:$0x1]
        %v1558 = vlaneseq
        %v1559 = vshrl.u32 %v1558, 7
        %v1560 = vsub.s32 0, %v1559
        %v1561 = vrot.slane %v1556, %v1560
        %v1563 = vadd.f32 %v1555, %v1561
        %1564 = vst [vmem:[%s530] sm:$0xff] %v1563
        %s1565 = sand.u32 %s287, 1
        %s1566 = scalar_lea.sflag [#allocation4], %s1565
        %s1567 = sand.u32 %s287, 1
        %s1568 = smul.addr %s1567, 8
        %s1569 = scalar_lea.vmem [#allocation14], %s1568
        // Predicated region
        $region93: #{tpu_custom_call.1} parent=63 // pred_check
          %p1570 = pneg %p297
        $region94: #{tpu_custom_call.1} parent=63 // pred_check_branch
          %1572 = sbr.rel (%p1570) target = $region96
        $region95: #{tpu_custom_call.1} parent=63 // pred_region
          %s1574 = ssub.s32 128, 128
          %1575 = vsyncadd %s1566, %s1574
          %s1576 = smul.addr %s33, 128
          %s1577 = scalar_lea.hbm %s11, %s1576
          %s1579 = sshll.u32 %s1569, 4
          %s1580 = int_to_ptr.vmem [resolvable:$true] %s1579
          %1582 = dma.vmem_to_hbm [thread:$0]  %s1580, 128, %s1577, %s1566
        $region96: #{tpu_custom_call.1} parent=63 // pred_fallthru
          _
      $region64: #{tpu_custom_call.1} parent=5 // pred_fallthru
        _
      %p1583 = scmp.le.s32.totalorder 2, %s28
      // Predicated region
      $region97: #{tpu_custom_call.1} parent=5 // pred_check
        %p1584 = pneg %p1583
      $region98: #{tpu_custom_call.1} parent=5 // pred_check_branch
        %1586 = sbr.rel (%p1584) target = $region100
      $region99: #{tpu_custom_call.1} parent=5 // pred_region
        %s1587 = ssub.s32 %s28, 2
        // Predicated region
        $region101: #{tpu_custom_call.1} parent=99 // pred_check
          %p1588 = pneg %p303
        $region102: #{tpu_custom_call.1} parent=99 // pred_check_branch
          %1590 = sbr.rel (%p1588) target = $region104
        $region103: #{tpu_custom_call.1} parent=99 // pred_region
          %s1591 = sand.u32 %s288, 1
          %s1592 = scalar_lea.sflag [#allocation4], %s1591
          %s1593 = sand.u32 %s288, 1
          %s1594 = smul.addr %s1593, 8
          %s1595 = scalar_lea.vmem [#allocation14], %s1594
          %1596 = dma.done %s1592, 128
        $region104: #{tpu_custom_call.1} parent=99 // pred_fallthru
          _
      $region100: #{tpu_custom_call.1} parent=5 // pred_fallthru
        _
    $region6: #{tpu_custom_call.1} parent=1 // loop_footer
      %s32 = sadd.s32 1, %s28
    $region7: #{tpu_custom_call.1} parent=1 // loop_footer_branch
      %27 = sbr.rel target = $region3
    $region8: #{tpu_custom_call.1} parent=1 // loop_exit
      _
    %1597 = vsyncpa [#allocation3], 1
    %s1598 = scalar_lea.sflag [#allocation3], 1
    %1599 = vsyncpa %s1598, 1
    %1600 = vsyncpa [#allocation6], 1
    %s1601 = scalar_lea.sflag [#allocation6], 1
    %1602 = vsyncpa %s1601, 1
    %1603 = vsyncpa [#allocation9], 1
    %1604 = vsyncpa [#allocation12], 1
    %1605 = vsyncpa [#allocation4], 1
    %s1606 = scalar_lea.sflag [#allocation4], 1
    %1607 = vsyncpa %s1606, 1

</llo_original>
